<compile_context>
chip_gen: v6e
topology: v6e:2x2x1
jax: 0.10.0
libtpu: 0.0.40
codegen_flags: <defaults>
</compile_context>

<pallas_src>
import functools
import math

import jax
import jax.numpy as jnp
from jax import lax
from jax.experimental import pallas as pl
from jax.experimental.pallas import tpu as pltpu


# ---------------------------------------------------------------------------
# Fused MHA kernel: one grid step == one batch element.
# ---------------------------------------------------------------------------
def mha_fused_kernel(q_ref, k_ref, v_ref,
                     wq_ref, wk_ref, wv_ref, wy_ref,
                     bq_ref, bk_ref, bv_ref, by_ref,
                     o_ref, *, heads, dk):
    def _linear(x, w_ref, b_ref):
        # nn.Linear: y = x @ W.T + b with W stored torch-style (Fout, Fin).
        # Contract Fin of x against Fin (axis 1) of W -> no transpose copy.
        return lax.dot_general(
            x, w_ref[...],
            dimension_numbers=(((1,), (1,)), ((), ())),
            preferred_element_type=jnp.float32,
        ) + b_ref[...]

    Q = _linear(q_ref[0], wq_ref, bq_ref)   # (S, F)
    K = _linear(k_ref[0], wk_ref, bk_ref)   # (S, F)
    V = _linear(v_ref[0], wv_ref, bv_ref)   # (S, F)

    # After the torch .view(...).transpose(-2,-1), q[s, d, h] == Q[s, h*dk + d]
    # and d_k (the softmax scale denominator) equals `heads`.
    scale = 1.0 / math.sqrt(heads)

    # scores[s, d, e] = sum_h Q[s, h*dk + d] * K[s, h*dk + e]
    # Unrolled over heads (static slices == in-kernel head split).
    scores = None
    for h in range(heads):
        qh = Q[:, h * dk:(h + 1) * dk]            # (S, dk)
        kh = K[:, h * dk:(h + 1) * dk]            # (S, dk)
        term = qh[:, :, None] * kh[:, None, :]    # (S, dk, dk)
        scores = term if scores is None else scores + term
    scores = scores * scale

    # Numerically-stable softmax over the last (dk) axis.
    scores = scores - jnp.max(scores, axis=-1, keepdims=True)
    p = jnp.exp(scores)
    denom = jnp.sum(p, axis=-1, keepdims=True)
    p = p * pl.reciprocal(denom, approx=False)    # exact; keeps 1e-5 tolerance

    # Head merge done in-kernel: y_merged[s, h*dk + d] = sum_e p[s,d,e] * V[s, h*dk + e]
    head_outs = []
    for h in range(heads):
        vh = V[:, h * dk:(h + 1) * dk]                        # (S, dk)
        head_outs.append(jnp.sum(p * vh[:, None, :], axis=-1))  # (S, dk)
    y_merged = jnp.concatenate(head_outs, axis=-1)            # (S, F)

    out = lax.dot_general(
        y_merged, wy_ref[...],
        dimension_numbers=(((1,), (1,)), ((), ())),
        preferred_element_type=jnp.float32,
    ) + by_ref[...]
    o_ref[0] = out.astype(o_ref.dtype)


def mha_forward_pallas(q, k, v, params, heads):
    """q/k/v: (B, S, F) float32. params: torch-layout weights (Fout, Fin) + biases."""
    B, S, F = q.shape
    assert F % heads == 0
    dk = F // heads

    kernel = functools.partial(mha_fused_kernel, heads=heads, dk=dk)

    blk_act = (1, S, F)
    act_idx = lambda b: (b, 0, 0)
    blk_w = (F, F)
    blk_b = (1, F)
    w_idx = lambda b: (0, 0)

    b2 = lambda x: x.reshape(1, F)

    return pl.pallas_call(
        kernel,
        out_shape=jax.ShapeDtypeStruct((B, S, F), q.dtype),
        grid_spec=pltpu.PrefetchScalarGridSpec(
            num_scalar_prefetch=0,
            grid=(B,),
            in_specs=[
                pl.BlockSpec(blk_act, act_idx),   # q
                pl.BlockSpec(blk_act, act_idx),   # k
                pl.BlockSpec(blk_act, act_idx),   # v
                pl.BlockSpec(blk_w, w_idx),       # wq
                pl.BlockSpec(blk_w, w_idx),       # wk
                pl.BlockSpec(blk_w, w_idx),       # wv
                pl.BlockSpec(blk_w, w_idx),       # wy
                pl.BlockSpec(blk_b, w_idx),       # bq
                pl.BlockSpec(blk_b, w_idx),       # bk
                pl.BlockSpec(blk_b, w_idx),       # bv
                pl.BlockSpec(blk_b, w_idx),       # by
            ],
            out_specs=pl.BlockSpec(blk_act, act_idx),
        ),
        # Batch axis is independent -> megacore sharding on v7x; all tensors
        # here are tiny so the default scoped VMEM limit is far from binding.
        compiler_params=pltpu.CompilerParams(dimension_semantics=("parallel",)),
    )(q, k, v,
      params["wq"], params["wk"], params["wv"], params["wy"],
      b2(params["bq"]), b2(params["bk"]), b2(params["bv"]), b2(params["by"]))


# ---------------------------------------------------------------------------
# Pure-JAX reference (mirrors the torch forward exactly, mask=None path).
# ---------------------------------------------------------------------------
def mha_forward_ref(q, k, v, params, heads):
    B, S, F = q.shape
    dk = F // heads

    def lin(x, w, b):
        return x @ w.T + b

    def split(x):
        return x.reshape(B, S, heads, dk).transpose(0, 1, 3, 2)   # (B,S,dk,H)

    Q = split(lin(q, params["wq"], params["bq"]))
    K = split(lin(k, params["wk"], params["bk"]))
    V = split(lin(v, params["wv"], params["bv"]))
    d_k = Q.shape[-1]                                             # == heads
    w = jnp.matmul(Q, jnp.swapaxes(K, -2, -1)) / math.sqrt(d_k)
    w = jax.nn.softmax(w, axis=-1)
    y = jnp.matmul(w, V)                                          # (B,S,dk,H)
    y = jnp.swapaxes(y, -2, -1).reshape(B, S, F)
    return lin(y, params["wy"], params["by"])


# ---------------------------------------------------------------------------
if __name__ == "__main__":
    B, S, F, HEADS = 2, 8, 32, 4

    key = jax.random.PRNGKey(0)
    keys = jax.random.split(key, 12)

    # Deterministic synthetic parameters (torch nn.Linear layout: W is (out, in)).
    params = {
        "wq": 0.08 * jax.random.normal(keys[0], (F, F), jnp.float32),
        "bq": 0.05 * jax.random.normal(keys[1], (F,), jnp.float32),
        "wk": 0.08 * jax.random.normal(keys[2], (F, F), jnp.float32),
        "bk": 0.05 * jax.random.normal(keys[3], (F,), jnp.float32),
        "wv": 0.08 * jax.random.normal(keys[4], (F, F), jnp.float32),
        "bv": 0.05 * jax.random.normal(keys[5], (F,), jnp.float32),
        "wy": 0.08 * jax.random.normal(keys[6], (F, F), jnp.float32),
        "by": 0.05 * jax.random.normal(keys[7], (F,), jnp.float32),
    }

    q = jax.random.normal(keys[8], (B, S, F), jnp.float32)
    k = jax.random.normal(keys[9], (B, S, F), jnp.float32)
    v = jax.random.normal(keys[10], (B, S, F), jnp.float32)

    out = mha_forward_pallas(q, k, v, params, HEADS)
    out = jax.block_until_ready(out)

    ref = mha_forward_ref(q, k, v, params, HEADS)
    assert out.shape == (B, S, F)
    assert jnp.allclose(out, ref, rtol=1e-5, atol=1e-5), (
        f"max abs err {jnp.max(jnp.abs(out - ref))}"
    )

    print("KERNEL_OK")
</pallas_src>

<mosaic_0001>
module attributes {stable_mosaic.version = 11 : i64} {
  func.func @mha_fused_kernel(%arg0: i32, %arg1: memref<1x8x32xf32, #tpu.memory_space<vmem>>, %arg2: memref<1x8x32xf32, #tpu.memory_space<vmem>>, %arg3: memref<1x8x32xf32, #tpu.memory_space<vmem>>, %arg4: memref<32x32xf32, #tpu.memory_space<vmem>>, %arg5: memref<32x32xf32, #tpu.memory_space<vmem>>, %arg6: memref<32x32xf32, #tpu.memory_space<vmem>>, %arg7: memref<32x32xf32, #tpu.memory_space<vmem>>, %arg8: memref<1x32xf32, #tpu.memory_space<vmem>>, %arg9: memref<1x32xf32, #tpu.memory_space<vmem>>, %arg10: memref<1x32xf32, #tpu.memory_space<vmem>>, %arg11: memref<1x32xf32, #tpu.memory_space<vmem>>, %arg12: memref<1x8x32xf32, #tpu.memory_space<vmem>>) attributes {dimension_semantics = [#tpu.dimension_semantics<parallel>], iteration_bounds = array<i64: 2>, scalar_prefetch = 0 : i64, scratch_operands = 0 : i64, tpu.core_type = #tpu.core_type<tc>, window_params = [{transform_indices = @transform_0, window_bounds = array<i64: 1, 8, 32>}, {transform_indices = @transform_1, window_bounds = array<i64: 1, 8, 32>}, {transform_indices = @transform_2, window_bounds = array<i64: 1, 8, 32>}, {pipeline_mode = #tpu.pipeline_mode<synchronous>, transform_indices = @transform_3, window_bounds = array<i64: 32, 32>}, {pipeline_mode = #tpu.pipeline_mode<synchronous>, transform_indices = @transform_4, window_bounds = array<i64: 32, 32>}, {pipeline_mode = #tpu.pipeline_mode<synchronous>, transform_indices = @transform_5, window_bounds = array<i64: 32, 32>}, {pipeline_mode = #tpu.pipeline_mode<synchronous>, transform_indices = @transform_6, window_bounds = array<i64: 32, 32>}, {pipeline_mode = #tpu.pipeline_mode<synchronous>, transform_indices = @transform_7, window_bounds = array<i64: 1, 32>}, {pipeline_mode = #tpu.pipeline_mode<synchronous>, transform_indices = @transform_8, window_bounds = array<i64: 1, 32>}, {pipeline_mode = #tpu.pipeline_mode<synchronous>, transform_indices = @transform_9, window_bounds = array<i64: 1, 32>}, {pipeline_mode = #tpu.pipeline_mode<synchronous>, transform_indices = @transform_10, window_bounds = array<i64: 1, 32>}, {transform_indices = @transform_11, window_bounds = array<i64: 1, 8, 32>}]} {
    %c0 = arith.constant 0 : index
    %c0_0 = arith.constant 0 : index
    %c0_1 = arith.constant 0 : index
    %0 = vector.load %arg1[%c0, %c0_0, %c0_1] : memref<1x8x32xf32, #tpu.memory_space<vmem>>, vector<1x8x32xf32>
    %1 = vector.shape_cast %0 : vector<1x8x32xf32> to vector<8x32xf32>
    %c0_2 = arith.constant 0 : index
    %c0_3 = arith.constant 0 : index
    %2 = vector.load %arg4[%c0_2, %c0_3] : memref<32x32xf32, #tpu.memory_space<vmem>>, vector<32x32xf32>
    %cst = arith.constant dense<0.000000e+00> : vector<8x32xf32>
    %3 = tpu.matmul %1, %2, %cst {dimension_numbers = #tpu.dot_dimension_numbers<[1], [1], [0], [0], [0, 0, 1, 0], [], []>} : vector<8x32xf32>, vector<32x32xf32>, vector<8x32xf32> -> vector<8x32xf32>
    %c0_4 = arith.constant 0 : index
    %c0_5 = arith.constant 0 : index
    %4 = vector.load %arg8[%c0_4, %c0_5] : memref<1x32xf32, #tpu.memory_space<vmem>>, vector<1x32xf32>
    %5 = vector.broadcast %4 : vector<1x32xf32> to vector<8x32xf32>
    %6 = arith.addf %3, %5 : vector<8x32xf32>
    %c0_6 = arith.constant 0 : index
    %c0_7 = arith.constant 0 : index
    %c0_8 = arith.constant 0 : index
    %7 = vector.load %arg2[%c0_6, %c0_7, %c0_8] : memref<1x8x32xf32, #tpu.memory_space<vmem>>, vector<1x8x32xf32>
    %8 = vector.shape_cast %7 : vector<1x8x32xf32> to vector<8x32xf32>
    %c0_9 = arith.constant 0 : index
    %c0_10 = arith.constant 0 : index
    %9 = vector.load %arg5[%c0_9, %c0_10] : memref<32x32xf32, #tpu.memory_space<vmem>>, vector<32x32xf32>
    %cst_11 = arith.constant dense<0.000000e+00> : vector<8x32xf32>
    %10 = tpu.matmul %8, %9, %cst_11 {dimension_numbers = #tpu.dot_dimension_numbers<[1], [1], [0], [0], [0, 0, 1, 0], [], []>} : vector<8x32xf32>, vector<32x32xf32>, vector<8x32xf32> -> vector<8x32xf32>
    %c0_12 = arith.constant 0 : index
    %c0_13 = arith.constant 0 : index
    %11 = vector.load %arg9[%c0_12, %c0_13] : memref<1x32xf32, #tpu.memory_space<vmem>>, vector<1x32xf32>
    %12 = vector.broadcast %11 : vector<1x32xf32> to vector<8x32xf32>
    %13 = arith.addf %10, %12 : vector<8x32xf32>
    %c0_14 = arith.constant 0 : index
    %c0_15 = arith.constant 0 : index
    %c0_16 = arith.constant 0 : index
    %14 = vector.load %arg3[%c0_14, %c0_15, %c0_16] : memref<1x8x32xf32, #tpu.memory_space<vmem>>, vector<1x8x32xf32>
    %15 = vector.shape_cast %14 : vector<1x8x32xf32> to vector<8x32xf32>
    %c0_17 = arith.constant 0 : index
    %c0_18 = arith.constant 0 : index
    %16 = vector.load %arg6[%c0_17, %c0_18] : memref<32x32xf32, #tpu.memory_space<vmem>>, vector<32x32xf32>
    %cst_19 = arith.constant dense<0.000000e+00> : vector<8x32xf32>
    %17 = tpu.matmul %15, %16, %cst_19 {dimension_numbers = #tpu.dot_dimension_numbers<[1], [1], [0], [0], [0, 0, 1, 0], [], []>} : vector<8x32xf32>, vector<32x32xf32>, vector<8x32xf32> -> vector<8x32xf32>
    %c0_20 = arith.constant 0 : index
    %c0_21 = arith.constant 0 : index
    %18 = vector.load %arg10[%c0_20, %c0_21] : memref<1x32xf32, #tpu.memory_space<vmem>>, vector<1x32xf32>
    %19 = vector.broadcast %18 : vector<1x32xf32> to vector<8x32xf32>
    %20 = arith.addf %17, %19 : vector<8x32xf32>
    %21 = vector.extract_strided_slice %6 {offsets = [0, 0], sizes = [8, 8], strides = [1, 1]} : vector<8x32xf32> to vector<8x8xf32>
    %22 = vector.extract_strided_slice %13 {offsets = [0, 0], sizes = [8, 8], strides = [1, 1]} : vector<8x32xf32> to vector<8x8xf32>
    %23 = vector.shape_cast %21 : vector<8x8xf32> to vector<8x8x1xf32>
    %24 = vector.shape_cast %22 : vector<8x8xf32> to vector<8x1x8xf32>
    %25 = vector.broadcast %23 : vector<8x8x1xf32> to vector<8x8x8xf32>
    %26 = vector.broadcast %24 : vector<8x1x8xf32> to vector<8x8x8xf32>
    %27 = arith.mulf %25, %26 : vector<8x8x8xf32>
    %28 = vector.extract_strided_slice %6 {offsets = [0, 8], sizes = [8, 8], strides = [1, 1]} : vector<8x32xf32> to vector<8x8xf32>
    %29 = vector.extract_strided_slice %13 {offsets = [0, 8], sizes = [8, 8], strides = [1, 1]} : vector<8x32xf32> to vector<8x8xf32>
    %30 = vector.shape_cast %28 : vector<8x8xf32> to vector<8x8x1xf32>
    %31 = vector.shape_cast %29 : vector<8x8xf32> to vector<8x1x8xf32>
    %32 = vector.broadcast %30 : vector<8x8x1xf32> to vector<8x8x8xf32>
    %33 = vector.broadcast %31 : vector<8x1x8xf32> to vector<8x8x8xf32>
    %34 = arith.mulf %32, %33 : vector<8x8x8xf32>
    %35 = arith.addf %27, %34 : vector<8x8x8xf32>
    %36 = vector.extract_strided_slice %6 {offsets = [0, 16], sizes = [8, 8], strides = [1, 1]} : vector<8x32xf32> to vector<8x8xf32>
    %37 = vector.extract_strided_slice %13 {offsets = [0, 16], sizes = [8, 8], strides = [1, 1]} : vector<8x32xf32> to vector<8x8xf32>
    %38 = vector.shape_cast %36 : vector<8x8xf32> to vector<8x8x1xf32>
    %39 = vector.shape_cast %37 : vector<8x8xf32> to vector<8x1x8xf32>
    %40 = vector.broadcast %38 : vector<8x8x1xf32> to vector<8x8x8xf32>
    %41 = vector.broadcast %39 : vector<8x1x8xf32> to vector<8x8x8xf32>
    %42 = arith.mulf %40, %41 : vector<8x8x8xf32>
    %43 = arith.addf %35, %42 : vector<8x8x8xf32>
    %44 = vector.extract_strided_slice %6 {offsets = [0, 24], sizes = [8, 8], strides = [1, 1]} : vector<8x32xf32> to vector<8x8xf32>
    %45 = vector.extract_strided_slice %13 {offsets = [0, 24], sizes = [8, 8], strides = [1, 1]} : vector<8x32xf32> to vector<8x8xf32>
    %46 = vector.shape_cast %44 : vector<8x8xf32> to vector<8x8x1xf32>
    %47 = vector.shape_cast %45 : vector<8x8xf32> to vector<8x1x8xf32>
    %48 = vector.broadcast %46 : vector<8x8x1xf32> to vector<8x8x8xf32>
    %49 = vector.broadcast %47 : vector<8x1x8xf32> to vector<8x8x8xf32>
    %50 = arith.mulf %48, %49 : vector<8x8x8xf32>
    %51 = arith.addf %43, %50 : vector<8x8x8xf32>
    %cst_22 = arith.constant 5.000000e-01 : f32
    %52 = vector.broadcast %cst_22 : f32 to vector<8x8x8xf32>
    %53 = arith.mulf %51, %52 : vector<8x8x8xf32>
    %cst_23 = arith.constant dense<0xFF800000> : vector<8x8xf32>
    %54 = vector.multi_reduction <maximumf>, %53, %cst_23 [2] : vector<8x8x8xf32> to vector<8x8xf32>
    %55 = vector.shape_cast %54 : vector<8x8xf32> to vector<8x8x1xf32>
    %56 = vector.broadcast %55 : vector<8x8x1xf32> to vector<8x8x8xf32>
    %57 = arith.subf %53, %56 : vector<8x8x8xf32>
    %58 = math.exp %57 : vector<8x8x8xf32>
    %cst_24 = arith.constant dense<0.000000e+00> : vector<8x8xf32>
    %59 = vector.multi_reduction <add>, %58, %cst_24 [2] : vector<8x8x8xf32> to vector<8x8xf32>
    %60 = vector.shape_cast %59 : vector<8x8xf32> to vector<8x8x1xf32>
    %61 = tpu.reciprocal %60 : vector<8x8x1xf32> -> vector<8x8x1xf32>
    %62 = vector.broadcast %61 : vector<8x8x1xf32> to vector<8x8x8xf32>
    %63 = arith.mulf %58, %62 : vector<8x8x8xf32>
    %64 = vector.extract_strided_slice %20 {offsets = [0, 0], sizes = [8, 8], strides = [1, 1]} : vector<8x32xf32> to vector<8x8xf32>
    %65 = vector.shape_cast %64 : vector<8x8xf32> to vector<8x1x8xf32>
    %66 = vector.broadcast %65 : vector<8x1x8xf32> to vector<8x8x8xf32>
    %67 = arith.mulf %63, %66 : vector<8x8x8xf32>
    %cst_25 = arith.constant dense<0.000000e+00> : vector<8x8xf32>
    %68 = vector.multi_reduction <add>, %67, %cst_25 [2] : vector<8x8x8xf32> to vector<8x8xf32>
    %69 = vector.extract_strided_slice %20 {offsets = [0, 8], sizes = [8, 8], strides = [1, 1]} : vector<8x32xf32> to vector<8x8xf32>
    %70 = vector.shape_cast %69 : vector<8x8xf32> to vector<8x1x8xf32>
    %71 = vector.broadcast %70 : vector<8x1x8xf32> to vector<8x8x8xf32>
    %72 = arith.mulf %63, %71 : vector<8x8x8xf32>
    %cst_26 = arith.constant dense<0.000000e+00> : vector<8x8xf32>
    %73 = vector.multi_reduction <add>, %72, %cst_26 [2] : vector<8x8x8xf32> to vector<8x8xf32>
    %74 = vector.extract_strided_slice %20 {offsets = [0, 16], sizes = [8, 8], strides = [1, 1]} : vector<8x32xf32> to vector<8x8xf32>
    %75 = vector.shape_cast %74 : vector<8x8xf32> to vector<8x1x8xf32>
    %76 = vector.broadcast %75 : vector<8x1x8xf32> to vector<8x8x8xf32>
    %77 = arith.mulf %63, %76 : vector<8x8x8xf32>
    %cst_27 = arith.constant dense<0.000000e+00> : vector<8x8xf32>
    %78 = vector.multi_reduction <add>, %77, %cst_27 [2] : vector<8x8x8xf32> to vector<8x8xf32>
    %79 = vector.extract_strided_slice %20 {offsets = [0, 24], sizes = [8, 8], strides = [1, 1]} : vector<8x32xf32> to vector<8x8xf32>
    %80 = vector.shape_cast %79 : vector<8x8xf32> to vector<8x1x8xf32>
    %81 = vector.broadcast %80 : vector<8x1x8xf32> to vector<8x8x8xf32>
    %82 = arith.mulf %63, %81 : vector<8x8x8xf32>
    %cst_28 = arith.constant dense<0.000000e+00> : vector<8x8xf32>
    %83 = vector.multi_reduction <add>, %82, %cst_28 [2] : vector<8x8x8xf32> to vector<8x8xf32>
    %84 = tpu.concatenate %68, %73, %78, %83 in 1 : vector<8x8xf32>, vector<8x8xf32>, vector<8x8xf32>, vector<8x8xf32> -> vector<8x32xf32>
    %c0_29 = arith.constant 0 : index
    %c0_30 = arith.constant 0 : index
    %85 = vector.load %arg7[%c0_29, %c0_30] : memref<32x32xf32, #tpu.memory_space<vmem>>, vector<32x32xf32>
    %cst_31 = arith.constant dense<0.000000e+00> : vector<8x32xf32>
    %86 = tpu.matmul %84, %85, %cst_31 {dimension_numbers = #tpu.dot_dimension_numbers<[1], [1], [0], [0], [0, 0, 1, 0], [], []>} : vector<8x32xf32>, vector<32x32xf32>, vector<8x32xf32> -> vector<8x32xf32>
    %c0_32 = arith.constant 0 : index
    %c0_33 = arith.constant 0 : index
    %87 = vector.load %arg11[%c0_32, %c0_33] : memref<1x32xf32, #tpu.memory_space<vmem>>, vector<1x32xf32>
    %88 = vector.broadcast %87 : vector<1x32xf32> to vector<8x32xf32>
    %89 = arith.addf %86, %88 : vector<8x32xf32>
    %c0_34 = arith.constant 0 : index
    %c0_35 = arith.constant 0 : index
    %c0_36 = arith.constant 0 : index
    %90 = vector.load %arg12[%c0_34, %c0_35, %c0_36] : memref<1x8x32xf32, #tpu.memory_space<vmem>>, vector<1x8x32xf32>
    %91 = vector.shape_cast %90 : vector<1x8x32xf32> to vector<8x32xf32>
    %92 = vector.shape_cast %89 : vector<8x32xf32> to vector<1x8x32xf32>
    tpu.vector_store %arg12[%c0_34, %c0_35, %c0_36], %92 {strides = array<i32>} : memref<1x8x32xf32, #tpu.memory_space<vmem>>, vector<1x8x32xf32>,
    return
  }
  func.func @transform_0(%arg0: i32) -> (i32, i32, i32) {
    %c0_i32 = arith.constant 0 : i32
    %c0_i32_0 = arith.constant 0 : i32
    %c0_i32_1 = arith.constant 0 : i32
    return %arg0, %c0_i32, %c0_i32_0 : i32, i32, i32
  }
  func.func @transform_1(%arg0: i32) -> (i32, i32, i32) {
    %c0_i32 = arith.constant 0 : i32
    %c0_i32_0 = arith.constant 0 : i32
    %c0_i32_1 = arith.constant 0 : i32
    return %arg0, %c0_i32, %c0_i32_0 : i32, i32, i32
  }
  func.func @transform_2(%arg0: i32) -> (i32, i32, i32) {
    %c0_i32 = arith.constant 0 : i32
    %c0_i32_0 = arith.constant 0 : i32
    %c0_i32_1 = arith.constant 0 : i32
    return %arg0, %c0_i32, %c0_i32_0 : i32, i32, i32
  }
  func.func @transform_3(%arg0: i32) -> (i32, i32) {
    %c0_i32 = arith.constant 0 : i32
    %c0_i32_0 = arith.constant 0 : i32
    %c0_i32_1 = arith.constant 0 : i32
    return %c0_i32, %c0_i32_0 : i32, i32
  }
  func.func @transform_4(%arg0: i32) -> (i32, i32) {
    %c0_i32 = arith.constant 0 : i32
    %c0_i32_0 = arith.constant 0 : i32
    %c0_i32_1 = arith.constant 0 : i32
    return %c0_i32, %c0_i32_0 : i32, i32
  }
  func.func @transform_5(%arg0: i32) -> (i32, i32) {
    %c0_i32 = arith.constant 0 : i32
    %c0_i32_0 = arith.constant 0 : i32
    %c0_i32_1 = arith.constant 0 : i32
    return %c0_i32, %c0_i32_0 : i32, i32
  }
  func.func @transform_6(%arg0: i32) -> (i32, i32) {
    %c0_i32 = arith.constant 0 : i32
    %c0_i32_0 = arith.constant 0 : i32
    %c0_i32_1 = arith.constant 0 : i32
    return %c0_i32, %c0_i32_0 : i32, i32
  }
  func.func @transform_7(%arg0: i32) -> (i32, i32) {
    %c0_i32 = arith.constant 0 : i32
    %c0_i32_0 = arith.constant 0 : i32
    %c0_i32_1 = arith.constant 0 : i32
    return %c0_i32, %c0_i32_0 : i32, i32
  }
  func.func @transform_8(%arg0: i32) -> (i32, i32) {
    %c0_i32 = arith.constant 0 : i32
    %c0_i32_0 = arith.constant 0 : i32
    %c0_i32_1 = arith.constant 0 : i32
    return %c0_i32, %c0_i32_0 : i32, i32
  }
  func.func @transform_9(%arg0: i32) -> (i32, i32) {
    %c0_i32 = arith.constant 0 : i32
    %c0_i32_0 = arith.constant 0 : i32
    %c0_i32_1 = arith.constant 0 : i32
    return %c0_i32, %c0_i32_0 : i32, i32
  }
  func.func @transform_10(%arg0: i32) -> (i32, i32) {
    %c0_i32 = arith.constant 0 : i32
    %c0_i32_0 = arith.constant 0 : i32
    %c0_i32_1 = arith.constant 0 : i32
    return %c0_i32, %c0_i32_0 : i32, i32
  }
  func.func @transform_11(%arg0: i32) -> (i32, i32, i32) {
    %c0_i32 = arith.constant 0 : i32
    %c0_i32_0 = arith.constant 0 : i32
    %c0_i32_1 = arith.constant 0 : i32
    return %arg0, %c0_i32, %c0_i32_0 : i32, i32, i32
  }
}

</mosaic_0001>

<llo_original>
// kernel: tpu_custom_call.1
$region0: #{tpu_custom_call.1}
  #allocation0 [shape = 'u32[]', space=smem, size = 0x4, offset = 0x4, fixed_abs, tag = 'smem constant byte address 0x4 - core index']
  #allocation1 [shape = 'u32[144,128]{1,0:T(1,128)}', space=vmem, size = 0x12000, scoped, tag = 'internal scratch']
  %s0 = inlined_call_operand.hbm [shape: f32[2,8,32], index: 0, kind: input, shape index: {}]
  %s1 = inlined_call_operand.hbm [shape: f32[2,8,32], index: 1, kind: input, shape index: {}]
  %s2 = inlined_call_operand.hbm [shape: f32[2,8,32], index: 2, kind: input, shape index: {}]
  %s3 = inlined_call_operand.hbm [shape: f32[32,32], index: 3, kind: input, shape index: {}]
  %s4 = inlined_call_operand.hbm [shape: f32[32,32], index: 4, kind: input, shape index: {}]
  %s5 = inlined_call_operand.hbm [shape: f32[32,32], index: 5, kind: input, shape index: {}]
  %s6 = inlined_call_operand.hbm [shape: f32[32,32], index: 6, kind: input, shape index: {}]
  %s7 = inlined_call_operand.vmem [shape: f32[1,32], index: 7, kind: input, shape index: {}]
  %s8 = inlined_call_operand.vmem [shape: f32[1,32], index: 8, kind: input, shape index: {}]
  %s9 = inlined_call_operand.vmem [shape: f32[1,32], index: 9, kind: input, shape index: {}]
  %s10 = inlined_call_operand.vmem [shape: f32[1,32], index: 10, kind: input, shape index: {}]
  %s11 = inlined_call_operand.hbm [shape: f32[2,8,32], index: 11, kind: output, shape index: {}]
  %s12 = sld [smem:[#allocation0]]
  $region105: #{tpu_custom_call.1} parent=0
    _
  %s14 = ssub.s32 1, %s12
  %s15 = scalar_select 0, %s14, %s12
  $region1: #{tpu_custom_call.1} parent=0
    #allocation2 [shape = 'u8[8192]{0}', space=vmem, size = 0x2000, scoped, tag = 'input window, operand 0']
    #allocation3 [shape = 's32[2]{0}', space=sflag, size = 0x8, scoped, tag = 'scoped memory for tpu_custom_call.1']
    #allocation4 [shape = 's32[2]{0}', space=sflag, size = 0x8, scoped, tag = 'scoped memory for tpu_custom_call.1']
    #allocation5 [shape = 'u8[8192]{0}', space=vmem, size = 0x2000, scoped, tag = 'input window, operand 1']
    #allocation6 [shape = 's32[2]{0}', space=sflag, size = 0x8, scoped, tag = 'scoped memory for tpu_custom_call.1']
    #allocation7 [shape = 'u8[8192]{0}', space=vmem, size = 0x2000, scoped, tag = 'input window, operand 2']
    #allocation8 [shape = 'u8[16384]{0}', space=vmem, size = 0x4000, scoped, tag = 'input window, operand 3, single buffered']
    #allocation9 [shape = 's32[1]{0}', space=sflag, size = 0x4, scoped, tag = 'scoped memory for tpu_custom_call.1']
    #allocation10 [shape = 'u8[16384]{0}', space=vmem, size = 0x4000, scoped, tag = 'input window, operand 4, single buffered']
    #allocation11 [shape = 'u8[16384]{0}', space=vmem, size = 0x4000, scoped, tag = 'input window, operand 5, single buffered']
    #allocation12 [shape = 's32[1]{0}', space=sflag, size = 0x4, scoped, tag = 'scoped memory for tpu_custom_call.1']
    #allocation13 [shape = 'u8[16384]{0}', space=vmem, size = 0x4000, scoped, tag = 'input window, operand 6, single buffered']
    #allocation14 [shape = 'u8[8192]{0}', space=vmem, size = 0x2000, scoped, tag = 'output window, operand 0']
    %16 = vsyncpa [#allocation3], 0
    %s17 = scalar_lea.sflag [#allocation3], 1
    %18 = vsyncpa %s17, 0
    %19 = vsyncpa [#allocation6], 0
    %s20 = scalar_lea.sflag [#allocation6], 1
    %21 = vsyncpa %s20, 0
    %22 = vsyncpa [#allocation9], 0
    %23 = vsyncpa [#allocation12], 0
    %24 = vsyncpa [#allocation4], 0
    %s25 = scalar_lea.sflag [#allocation4], 1
    %26 = vsyncpa %s25, 0
    loop: start=0, step=1, limit=4
    $region2: #{tpu_custom_call.1} parent=1 // loop_pre_header
      _
    $region3: #{tpu_custom_call.1} parent=1 // loop_header
      %s28 = sphi 0, %s32
      %p29 = scmp.ge.s32.totalorder %s28, 4
      %s38 = sphi 0, %s40
      %s41 = sphi 0, %s38
      %s42 = sphi 0, %s41
      %s58 = sphi 0, %s42
      %s64 = sphi 0, %s66
      %s67 = sphi 0, %s64
      %s68 = sphi 0, %s67
      %s84 = sphi 0, %s68
      %s90 = sphi 0, %s92
      %s93 = sphi 0, %s90
      %s94 = sphi 0, %s93
      %s110 = sphi 0, %s94
      %s114 = sphi 0, %s114
      %s116 = sphi 0, %s114
      %s117 = sphi 0, %s116
      %s131 = sphi 0, %s117
      %s135 = sphi 0, %s135
      %s137 = sphi 0, %s135
      %s138 = sphi 0, %s137
      %s152 = sphi 0, %s138
      %s156 = sphi 0, %s156
      %s158 = sphi 0, %s156
      %s159 = sphi 0, %s158
      %s173 = sphi 0, %s159
      %s177 = sphi 0, %s177
      %s179 = sphi 0, %s177
      %s180 = sphi 0, %s179
      %s194 = sphi 0, %s180
      %s198 = sphi 0, %s198
      %s200 = sphi 0, %s198
      %s201 = sphi 0, %s200
      %s215 = sphi 0, %s201
      %s219 = sphi 0, %s219
      %s221 = sphi 0, %s219
      %s222 = sphi 0, %s221
      %s236 = sphi 0, %s222
      %s240 = sphi 0, %s240
      %s242 = sphi 0, %s240
      %s243 = sphi 0, %s242
      %s257 = sphi 0, %s243
      %s261 = sphi 0, %s261
      %s263 = sphi 0, %s261
      %s264 = sphi 0, %s263
      %s278 = sphi 0, %s264
      %s284 = sphi 0, %s286
      %s287 = sphi 0, %s284
      %s288 = sphi 0, %s287
      %s304 = sphi 0, %s288
    $region4: #{tpu_custom_call.1} parent=1 // loop_header_branch
      %31 = sbr.rel (%p29) target = $region8
    $region5: #{tpu_custom_call.1} parent=1 // loop_body
      %s33 = ssub.s32 %s28, 1
      %s34 = ssub.s32 %s28, 2
      %s35 = sadd.s32 %s28, 1
      %s36 = ssub.s32 %s28, %s35
      %p37 = scmp.eq.s32.totalorder %s36, 0
      %s39 = sadd.s32 %s38, 1
      %s40 = scalar_select %p37, %s38, %s39
      %p43 = pneg %p37
      %p44 = scmp.eq.s32.totalorder %s28, 1
      %p45 = por %p43, %p44
      %p46 = scmp.ne.s32.totalorder %s38, %s41
      %p47 = scmp.eq.s32.totalorder %s28, 0
      %p48 = por %p46, %p47
      %p49 = scmp.ne.s32.totalorder %s38, %s41
      %p50 = scmp.eq.s32.totalorder %s33, 1
      %p51 = por %p49, %p50
      %p52 = scmp.ne.s32.totalorder %s41, %s42
      %p53 = scmp.eq.s32.totalorder %s33, 0
      %p54 = por %p52, %p53
      %p55 = scmp.ne.s32.totalorder %s41, %s42
      %p56 = scmp.eq.s32.totalorder %s34, 1
      %p57 = por %p55, %p56
      %p59 = scmp.ne.s32.totalorder %s42, %s58
      %p60 = scmp.eq.s32.totalorder %s34, 0
      %p61 = por %p59, %p60
      %s62 = ssub.s32 %s28, %s35
      %p63 = scmp.eq.s32.totalorder %s62, 0
      %s65 = sadd.s32 %s64, 1
      %s66 = scalar_select %p63, %s64, %s65
      %p69 = pneg %p63
      %p70 = scmp.eq.s32.totalorder %s28, 1
      %p71 = por %p69, %p70
      %p72 = scmp.ne.s32.totalorder %s64, %s67
      %p73 = scmp.eq.s32.totalorder %s28, 0
      %p74 = por %p72, %p73
      %p75 = scmp.ne.s32.totalorder %s64, %s67
      %p76 = scmp.eq.s32.totalorder %s33, 1
      %p77 = por %p75, %p76
      %p78 = scmp.ne.s32.totalorder %s67, %s68
      %p79 = scmp.eq.s32.totalorder %s33, 0
      %p80 = por %p78, %p79
      %p81 = scmp.ne.s32.totalorder %s67, %s68
      %p82 = scmp.eq.s32.totalorder %s34, 1
      %p83 = por %p81, %p82
      %p85 = scmp.ne.s32.totalorder %s68, %s84
      %p86 = scmp.eq.s32.totalorder %s34, 0
      %p87 = por %p85, %p86
      %s88 = ssub.s32 %s28, %s35
      %p89 = scmp.eq.s32.totalorder %s88, 0
      %s91 = sadd.s32 %s90, 1
      %s92 = scalar_select %p89, %s90, %s91
      %p95 = pneg %p89
      %p96 = scmp.eq.s32.totalorder %s28, 1
      %p97 = por %p95, %p96
      %p98 = scmp.ne.s32.totalorder %s90, %s93
      %p99 = scmp.eq.s32.totalorder %s28, 0
      %p100 = por %p98, %p99
      %p101 = scmp.ne.s32.totalorder %s90, %s93
      %p102 = scmp.eq.s32.totalorder %s33, 1
      %p103 = por %p101, %p102
      %p104 = scmp.ne.s32.totalorder %s93, %s94
      %p105 = scmp.eq.s32.totalorder %s33, 0
      %p106 = por %p104, %p105
      %p107 = scmp.ne.s32.totalorder %s93, %s94
      %p108 = scmp.eq.s32.totalorder %s34, 1
      %p109 = por %p107, %p108
      %p111 = scmp.ne.s32.totalorder %s94, %s110
      %p112 = scmp.eq.s32.totalorder %s34, 0
      %p113 = por %p111, %p112
      %s115 = sadd.s32 %s114, 1
      %p118 = scmp.eq.s32.totalorder %s28, 1
      %p119 = scmp.ne.s32.totalorder %s114, %s116
      %p120 = scmp.eq.s32.totalorder %s28, 0
      %p121 = por %p119, %p120
      %p122 = scmp.ne.s32.totalorder %s114, %s116
      %p123 = scmp.eq.s32.totalorder %s33, 1
      %p124 = por %p122, %p123
      %p125 = scmp.ne.s32.totalorder %s116, %s117
      %p126 = scmp.eq.s32.totalorder %s33, 0
      %p127 = por %p125, %p126
      %p128 = scmp.ne.s32.totalorder %s116, %s117
      %p129 = scmp.eq.s32.totalorder %s34, 1
      %p130 = por %p128, %p129
      %p132 = scmp.ne.s32.totalorder %s117, %s131
      %p133 = scmp.eq.s32.totalorder %s34, 0
      %p134 = por %p132, %p133
      %s136 = sadd.s32 %s135, 1
      %p139 = scmp.eq.s32.totalorder %s28, 1
      %p140 = scmp.ne.s32.totalorder %s135, %s137
      %p141 = scmp.eq.s32.totalorder %s28, 0
      %p142 = por %p140, %p141
      %p143 = scmp.ne.s32.totalorder %s135, %s137
      %p144 = scmp.eq.s32.totalorder %s33, 1
      %p145 = por %p143, %p144
      %p146 = scmp.ne.s32.totalorder %s137, %s138
      %p147 = scmp.eq.s32.totalorder %s33, 0
      %p148 = por %p146, %p147
      %p149 = scmp.ne.s32.totalorder %s137, %s138
      %p150 = scmp.eq.s32.totalorder %s34, 1
      %p151 = por %p149, %p150
      %p153 = scmp.ne.s32.totalorder %s138, %s152
      %p154 = scmp.eq.s32.totalorder %s34, 0
      %p155 = por %p153, %p154
      %s157 = sadd.s32 %s156, 1
      %p160 = scmp.eq.s32.totalorder %s28, 1
      %p161 = scmp.ne.s32.totalorder %s156, %s158
      %p162 = scmp.eq.s32.totalorder %s28, 0
      %p163 = por %p161, %p162
      %p164 = scmp.ne.s32.totalorder %s156, %s158
      %p165 = scmp.eq.s32.totalorder %s33, 1
      %p166 = por %p164, %p165
      %p167 = scmp.ne.s32.totalorder %s158, %s159
      %p168 = scmp.eq.s32.totalorder %s33, 0
      %p169 = por %p167, %p168
      %p170 = scmp.ne.s32.totalorder %s158, %s159
      %p171 = scmp.eq.s32.totalorder %s34, 1
      %p172 = por %p170, %p171
      %p174 = scmp.ne.s32.totalorder %s159, %s173
      %p175 = scmp.eq.s32.totalorder %s34, 0
      %p176 = por %p174, %p175
      %s178 = sadd.s32 %s177, 1
      %p181 = scmp.eq.s32.totalorder %s28, 1
      %p182 = scmp.ne.s32.totalorder %s177, %s179
      %p183 = scmp.eq.s32.totalorder %s28, 0
      %p184 = por %p182, %p183
      %p185 = scmp.ne.s32.totalorder %s177, %s179
      %p186 = scmp.eq.s32.totalorder %s33, 1
      %p187 = por %p185, %p186
      %p188 = scmp.ne.s32.totalorder %s179, %s180
      %p189 = scmp.eq.s32.totalorder %s33, 0
      %p190 = por %p188, %p189
      %p191 = scmp.ne.s32.totalorder %s179, %s180
      %p192 = scmp.eq.s32.totalorder %s34, 1
      %p193 = por %p191, %p192
      %p195 = scmp.ne.s32.totalorder %s180, %s194
      %p196 = scmp.eq.s32.totalorder %s34, 0
      %p197 = por %p195, %p196
      %s199 = sadd.s32 %s198, 1
      %p202 = scmp.eq.s32.totalorder %s28, 1
      %p203 = scmp.ne.s32.totalorder %s198, %s200
      %p204 = scmp.eq.s32.totalorder %s28, 0
      %p205 = por %p203, %p204
      %p206 = scmp.ne.s32.totalorder %s198, %s200
      %p207 = scmp.eq.s32.totalorder %s33, 1
      %p208 = por %p206, %p207
      %p209 = scmp.ne.s32.totalorder %s200, %s201
      %p210 = scmp.eq.s32.totalorder %s33, 0
      %p211 = por %p209, %p210
      %p212 = scmp.ne.s32.totalorder %s200, %s201
      %p213 = scmp.eq.s32.totalorder %s34, 1
      %p214 = por %p212, %p213
      %p216 = scmp.ne.s32.totalorder %s201, %s215
      %p217 = scmp.eq.s32.totalorder %s34, 0
      %p218 = por %p216, %p217
      %s220 = sadd.s32 %s219, 1
      %p223 = scmp.eq.s32.totalorder %s28, 1
      %p224 = scmp.ne.s32.totalorder %s219, %s221
      %p225 = scmp.eq.s32.totalorder %s28, 0
      %p226 = por %p224, %p225
      %p227 = scmp.ne.s32.totalorder %s219, %s221
      %p228 = scmp.eq.s32.totalorder %s33, 1
      %p229 = por %p227, %p228
      %p230 = scmp.ne.s32.totalorder %s221, %s222
      %p231 = scmp.eq.s32.totalorder %s33, 0
      %p232 = por %p230, %p231
      %p233 = scmp.ne.s32.totalorder %s221, %s222
      %p234 = scmp.eq.s32.totalorder %s34, 1
      %p235 = por %p233, %p234
      %p237 = scmp.ne.s32.totalorder %s222, %s236
      %p238 = scmp.eq.s32.totalorder %s34, 0
      %p239 = por %p237, %p238
      %s241 = sadd.s32 %s240, 1
      %p244 = scmp.eq.s32.totalorder %s28, 1
      %p245 = scmp.ne.s32.totalorder %s240, %s242
      %p246 = scmp.eq.s32.totalorder %s28, 0
      %p247 = por %p245, %p246
      %p248 = scmp.ne.s32.totalorder %s240, %s242
      %p249 = scmp.eq.s32.totalorder %s33, 1
      %p250 = por %p248, %p249
      %p251 = scmp.ne.s32.totalorder %s242, %s243
      %p252 = scmp.eq.s32.totalorder %s33, 0
      %p253 = por %p251, %p252
      %p254 = scmp.ne.s32.totalorder %s242, %s243
      %p255 = scmp.eq.s32.totalorder %s34, 1
      %p256 = por %p254, %p255
      %p258 = scmp.ne.s32.totalorder %s243, %s257
      %p259 = scmp.eq.s32.totalorder %s34, 0
      %p260 = por %p258, %p259
      %s262 = sadd.s32 %s261, 1
      %p265 = scmp.eq.s32.totalorder %s28, 1
      %p266 = scmp.ne.s32.totalorder %s261, %s263
      %p267 = scmp.eq.s32.totalorder %s28, 0
      %p268 = por %p266, %p267
      %p269 = scmp.ne.s32.totalorder %s261, %s263
      %p270 = scmp.eq.s32.totalorder %s33, 1
      %p271 = por %p269, %p270
      %p272 = scmp.ne.s32.totalorder %s263, %s264
      %p273 = scmp.eq.s32.totalorder %s33, 0
      %p274 = por %p272, %p273
      %p275 = scmp.ne.s32.totalorder %s263, %s264
      %p276 = scmp.eq.s32.totalorder %s34, 1
      %p277 = por %p275, %p276
      %p279 = scmp.ne.s32.totalorder %s264, %s278
      %p280 = scmp.eq.s32.totalorder %s34, 0
      %p281 = por %p279, %p280
      %s282 = ssub.s32 %s28, %s35
      %p283 = scmp.eq.s32.totalorder %s282, 0
      %s285 = sadd.s32 %s284, 1
      %s286 = scalar_select %p283, %s284, %s285
      %p289 = pneg %p283
      %p290 = scmp.eq.s32.totalorder %s28, 1
      %p291 = por %p289, %p290
      %p292 = scmp.ne.s32.totalorder %s284, %s287
      %p293 = scmp.eq.s32.totalorder %s28, 0
      %p294 = por %p292, %p293
      %p295 = scmp.ne.s32.totalorder %s284, %s287
      %p296 = scmp.eq.s32.totalorder %s33, 1
      %p297 = por %p295, %p296
      %p298 = scmp.ne.s32.totalorder %s287, %s288
      %p299 = scmp.eq.s32.totalorder %s33, 0
      %p300 = por %p298, %p299
      %p301 = scmp.ne.s32.totalorder %s287, %s288
      %p302 = scmp.eq.s32.totalorder %s34, 1
      %p303 = por %p301, %p302
      %p305 = scmp.ne.s32.totalorder %s288, %s304
      %p306 = scmp.eq.s32.totalorder %s34, 0
      %p307 = por %p305, %p306
      %p308 = scmp.le.s32.totalorder 1, %s28
      %p309 = scmp.lt.s32.totalorder %s28, 3
      %p310 = pnand %p308, %p309
      %p311 = pneg %p310
      // Predicated region
      $region9: #{tpu_custom_call.1} parent=5 // pred_check
        _
      $region10: #{tpu_custom_call.1} parent=5 // pred_check_branch
        %313 = sbr.rel (%p310) target = $region12
      $region11: #{tpu_custom_call.1} parent=5 // pred_region
        %s314 = ssub.s32 %s28, 1
        // Predicated region
        $region13: #{tpu_custom_call.1} parent=11 // pred_check
          %p315 = pneg %p127
        $region14: #{tpu_custom_call.1} parent=11 // pred_check_branch
          %317 = sbr.rel (%p315) target = $region16
        $region15: #{tpu_custom_call.1} parent=11 // pred_region
          %s319 = ssub.s32 512, 512
          %320 = vsyncadd [#allocation9], %s319
          %s321 = sshll.u32 [#allocation8], 4
          %s322 = int_to_ptr.vmem [resolvable:$true] %s321
          %327 = dma.hbm_to_vmem [thread:$0]  %s3, 512, %s322, [#allocation9], 128, 128, 8
        $region16: #{tpu_custom_call.1} parent=11 // pred_fallthru
          _
        // Predicated region
        $region17: #{tpu_custom_call.1} parent=11 // pred_check
          %p328 = pneg %p148
        $region18: #{tpu_custom_call.1} parent=11 // pred_check_branch
          %330 = sbr.rel (%p328) target = $region20
        $region19: #{tpu_custom_call.1} parent=11 // pred_region
          %s332 = ssub.s32 512, 512
          %333 = vsyncadd [#allocation9], %s332
          %s334 = sshll.u32 [#allocation10], 4
          %s335 = int_to_ptr.vmem [resolvable:$true] %s334
          %340 = dma.hbm_to_vmem [thread:$0]  %s4, 512, %s335, [#allocation9], 128, 128, 8
        $region20: #{tpu_custom_call.1} parent=11 // pred_fallthru
          _
        // Predicated region
        $region21: #{tpu_custom_call.1} parent=11 // pred_check
          %p341 = pneg %p169
        $region22: #{tpu_custom_call.1} parent=11 // pred_check_branch
          %343 = sbr.rel (%p341) target = $region24
        $region23: #{tpu_custom_call.1} parent=11 // pred_region
          %s345 = ssub.s32 512, 512
          %346 = vsyncadd [#allocation12], %s345
          %s347 = sshll.u32 [#allocation11], 4
          %s348 = int_to_ptr.vmem [resolvable:$true] %s347
          %353 = dma.hbm_to_vmem [thread:$0]  %s5, 512, %s348, [#allocation12], 128, 128, 8
        $region24: #{tpu_custom_call.1} parent=11 // pred_fallthru
          _
        // Predicated region
        $region25: #{tpu_custom_call.1} parent=11 // pred_check
          %p354 = pneg %p190
        $region26: #{tpu_custom_call.1} parent=11 // pred_check_branch
          %356 = sbr.rel (%p354) target = $region28
        $region27: #{tpu_custom_call.1} parent=11 // pred_region
          %s358 = ssub.s32 512, 512
          %359 = vsyncadd [#allocation12], %s358
          %s360 = sshll.u32 [#allocation13], 4
          %s361 = int_to_ptr.vmem [resolvable:$true] %s360
          %366 = dma.hbm_to_vmem [thread:$0]  %s6, 512, %s361, [#allocation12], 128, 128, 8
        $region28: #{tpu_custom_call.1} parent=11 // pred_fallthru
          _
        // Predicated region
        $region29: #{tpu_custom_call.1} parent=11 // pred_check
          %p367 = pneg %p211
        $region30: #{tpu_custom_call.1} parent=11 // pred_check_branch
          %369 = sbr.rel (%p367) target = $region32
        $region31: #{tpu_custom_call.1} parent=11 // pred_region
          _
        $region32: #{tpu_custom_call.1} parent=11 // pred_fallthru
          _
        // Predicated region
        $region33: #{tpu_custom_call.1} parent=11 // pred_check
          %p370 = pneg %p232
        $region34: #{tpu_custom_call.1} parent=11 // pred_check_branch
          %372 = sbr.rel (%p370) target = $region36
        $region35: #{tpu_custom_call.1} parent=11 // pred_region
          _
        $region36: #{tpu_custom_call.1} parent=11 // pred_fallthru
          _
        // Predicated region
        $region37: #{tpu_custom_call.1} parent=11 // pred_check
          %p373 = pneg %p253
        $region38: #{tpu_custom_call.1} parent=11 // pred_check_branch
          %375 = sbr.rel (%p373) target = $region40
        $region39: #{tpu_custom_call.1} parent=11 // pred_region
          _
        $region40: #{tpu_custom_call.1} parent=11 // pred_fallthru
          _
        // Predicated region
        $region41: #{tpu_custom_call.1} parent=11 // pred_check
          %p376 = pneg %p274
        $region42: #{tpu_custom_call.1} parent=11 // pred_check_branch
          %378 = sbr.rel (%p376) target = $region44
        $region43: #{tpu_custom_call.1} parent=11 // pred_region
          _
        $region44: #{tpu_custom_call.1} parent=11 // pred_fallthru
          _
      $region12: #{tpu_custom_call.1} parent=5 // pred_fallthru
        _
      %p379 = scmp.lt.s32.totalorder %s28, 2
      // Predicated region
      $region45: #{tpu_custom_call.1} parent=5 // pred_check
        %p380 = pneg %p379
      $region46: #{tpu_custom_call.1} parent=5 // pred_check_branch
        %382 = sbr.rel (%p380) target = $region48
      $region47: #{tpu_custom_call.1} parent=5 // pred_region
        // Predicated region
        $region49: #{tpu_custom_call.1} parent=47 // pred_check
          %p383 = pneg %p48
        $region50: #{tpu_custom_call.1} parent=47 // pred_check_branch
          %385 = sbr.rel (%p383) target = $region52
        $region51: #{tpu_custom_call.1} parent=47 // pred_region
          %s386 = sand.u32 %s38, 1
          %s387 = scalar_lea.sflag [#allocation3], %s386
          %s388 = sand.u32 %s38, 1
          %s389 = smul.addr %s388, 8
          %s390 = scalar_lea.vmem [#allocation2], %s389
          %s392 = ssub.s32 128, 128
          %393 = vsyncadd %s387, %s392
          %s394 = smul.addr %s28, 128
          %s395 = scalar_lea.hbm %s0, %s394
          %s397 = sshll.u32 %s390, 4
          %s398 = int_to_ptr.vmem [resolvable:$true] %s397
          %400 = dma.hbm_to_vmem [thread:$0]  %s395, 128, %s398, %s387
        $region52: #{tpu_custom_call.1} parent=47 // pred_fallthru
          _
        // Predicated region
        $region53: #{tpu_custom_call.1} parent=47 // pred_check
          %p401 = pneg %p74
        $region54: #{tpu_custom_call.1} parent=47 // pred_check_branch
          %403 = sbr.rel (%p401) target = $region56
        $region55: #{tpu_custom_call.1} parent=47 // pred_region
          %s404 = sand.u32 %s28, 1
          %s405 = scalar_lea.sflag [#allocation6], %s404
          %s406 = sand.u32 %s64, 1
          %s407 = smul.addr %s406, 8
          %s408 = scalar_lea.vmem [#allocation5], %s407
          %s410 = ssub.s32 128, 128
          %411 = vsyncadd %s405, %s410
          %s412 = smul.addr %s28, 128
          %s413 = scalar_lea.hbm %s1, %s412
          %s415 = sshll.u32 %s408, 4
          %s416 = int_to_ptr.vmem [resolvable:$true] %s415
          %418 = dma.hbm_to_vmem [thread:$0]  %s413, 128, %s416, %s405
        $region56: #{tpu_custom_call.1} parent=47 // pred_fallthru
          _
        // Predicated region
        $region57: #{tpu_custom_call.1} parent=47 // pred_check
          %p419 = pneg %p100
        $region58: #{tpu_custom_call.1} parent=47 // pred_check_branch
          %421 = sbr.rel (%p419) target = $region60
        $region59: #{tpu_custom_call.1} parent=47 // pred_region
          %s422 = sand.u32 %s28, 1
          %s423 = scalar_lea.sflag [#allocation6], %s422
          %s424 = sand.u32 %s90, 1
          %s425 = smul.addr %s424, 8
          %s426 = scalar_lea.vmem [#allocation7], %s425
          %s428 = ssub.s32 128, 128
          %429 = vsyncadd %s423, %s428
          %s430 = smul.addr %s28, 128
          %s431 = scalar_lea.hbm %s2, %s430
          %s433 = sshll.u32 %s426, 4
          %s434 = int_to_ptr.vmem [resolvable:$true] %s433
          %436 = dma.hbm_to_vmem [thread:$0]  %s431, 128, %s434, %s423
        $region60: #{tpu_custom_call.1} parent=47 // pred_fallthru
          _
      $region48: #{tpu_custom_call.1} parent=5 // pred_fallthru
        _
      %p437 = scmp.le.s32.totalorder 1, %s28
      %p438 = scmp.lt.s32.totalorder %s28, 3
      %p439 = pnand %p437, %p438
      %p440 = pneg %p439
      // Predicated region
      $region61: #{tpu_custom_call.1} parent=5 // pred_check
        _
      $region62: #{tpu_custom_call.1} parent=5 // pred_check_branch
        %442 = sbr.rel (%p439) target = $region64
      $region63: #{tpu_custom_call.1} parent=5 // pred_region
        %s443 = ssub.s32 %s28, 1
        %s444 = sand.u32 %s41, 1
        %s445 = scalar_lea.sflag [#allocation3], %s444
        %s446 = sand.u32 %s41, 1
        %s447 = smul.addr %s446, 8
        %s448 = scalar_lea.vmem [#allocation2], %s447
        // Predicated region
        $region65: #{tpu_custom_call.1} parent=63 // pred_check
          %p449 = pneg %p54
        $region66: #{tpu_custom_call.1} parent=63 // pred_check_branch
          %451 = sbr.rel (%p449) target = $region68
        $region67: #{tpu_custom_call.1} parent=63 // pred_region
          %452 = dma.done %s445, 128
        $region68: #{tpu_custom_call.1} parent=63 // pred_fallthru
          _
        %s453 = sand.u32 %s33, 1
        %s454 = scalar_lea.sflag [#allocation6], %s453
        %s455 = sand.u32 %s67, 1
        %s456 = smul.addr %s455, 8
        %s457 = scalar_lea.vmem [#allocation5], %s456
        // Predicated region
        $region69: #{tpu_custom_call.1} parent=63 // pred_check
          %p458 = pneg %p80
        $region70: #{tpu_custom_call.1} parent=63 // pred_check_branch
          %460 = sbr.rel (%p458) target = $region72
        $region71: #{tpu_custom_call.1} parent=63 // pred_region
          %461 = dma.done %s454, 128
        $region72: #{tpu_custom_call.1} parent=63 // pred_fallthru
          _
        %s462 = sand.u32 %s33, 1
        %s463 = scalar_lea.sflag [#allocation6], %s462
        %s464 = sand.u32 %s93, 1
        %s465 = smul.addr %s464, 8
        %s466 = scalar_lea.vmem [#allocation7], %s465
        // Predicated region
        $region73: #{tpu_custom_call.1} parent=63 // pred_check
          %p467 = pneg %p106
        $region74: #{tpu_custom_call.1} parent=63 // pred_check_branch
          %469 = sbr.rel (%p467) target = $region76
        $region75: #{tpu_custom_call.1} parent=63 // pred_region
          %470 = dma.done %s463, 128
        $region76: #{tpu_custom_call.1} parent=63 // pred_fallthru
          _
        // Predicated region
        $region77: #{tpu_custom_call.1} parent=63 // pred_check
          %p471 = pneg %p127
        $region78: #{tpu_custom_call.1} parent=63 // pred_check_branch
          %473 = sbr.rel (%p471) target = $region80
        $region79: #{tpu_custom_call.1} parent=63 // pred_region
          %474 = dma.done [#allocation9], 512
        $region80: #{tpu_custom_call.1} parent=63 // pred_fallthru
          _
        // Predicated region
        $region81: #{tpu_custom_call.1} parent=63 // pred_check
          %p475 = pneg %p148
        $region82: #{tpu_custom_call.1} parent=63 // pred_check_branch
          %477 = sbr.rel (%p475) target = $region84
        $region83: #{tpu_custom_call.1} parent=63 // pred_region
          %478 = dma.done [#allocation9], 512
        $region84: #{tpu_custom_call.1} parent=63 // pred_fallthru
          _
        // Predicated region
        $region85: #{tpu_custom_call.1} parent=63 // pred_check
          %p479 = pneg %p169
        $region86: #{tpu_custom_call.1} parent=63 // pred_check_branch
          %481 = sbr.rel (%p479) target = $region88
        $region87: #{tpu_custom_call.1} parent=63 // pred_region
          %482 = dma.done [#allocation12], 512
        $region88: #{tpu_custom_call.1} parent=63 // pred_fallthru
          _
        // Predicated region
        $region89: #{tpu_custom_call.1} parent=63 // pred_check
          %p483 = pneg %p190
        $region90: #{tpu_custom_call.1} parent=63 // pred_check_branch
          %485 = sbr.rel (%p483) target = $region92
        $region91: #{tpu_custom_call.1} parent=63 // pred_region
          %486 = dma.done [#allocation12], 512
        $region92: #{tpu_custom_call.1} parent=63 // pred_fallthru
          _
        %s487 = sand.u32 %s41, 1
        %s488 = scalar_lea.sflag [#allocation3], %s487
        %s489 = sand.u32 %s41, 1
        %s490 = smul.addr %s489, 8
        %s491 = scalar_lea.vmem [#allocation2], %s490
        %p492 = pneg %p54
        %p493 = pneg %p51
        %s494 = sand.u32 %s33, 1
        %s495 = scalar_lea.sflag [#allocation6], %s494
        %s496 = sand.u32 %s67, 1
        %s497 = smul.addr %s496, 8
        %s498 = scalar_lea.vmem [#allocation5], %s497
        %p499 = pneg %p80
        %p500 = pneg %p77
        %s501 = sand.u32 %s33, 1
        %s502 = scalar_lea.sflag [#allocation6], %s501
        %s503 = sand.u32 %s93, 1
        %s504 = smul.addr %s503, 8
        %s505 = scalar_lea.vmem [#allocation7], %s504
        %p506 = pneg %p106
        %p507 = pneg %p103
        %p508 = pneg %p127
        %p509 = pneg %p124
        %p510 = pneg %p148
        %p511 = pneg %p145
        %p512 = pneg %p169
        %p513 = pneg %p166
        %p514 = pneg %p190
        %p515 = pneg %p187
        %p516 = pneg %p211
        %p517 = pneg %p208
        %p518 = pneg %p232
        %p519 = pneg %p229
        %p520 = pneg %p253
        %p521 = pneg %p250
        %p522 = pneg %p274
        %p523 = pneg %p271
        %p524 = pneg %p300
        %p525 = pneg %p297
        %s526 = sand.u32 %s287, 1
        %s527 = scalar_lea.sflag [#allocation4], %s526
        %s528 = sand.u32 %s287, 1
        %s529 = smul.addr %s528, 8
        %s530 = scalar_lea.vmem [#allocation14], %s529
        %v531 = vld [vmem:[%s448] sm:$0xff]
        %v532 = vld [vmem:[#allocation8] sm:$0xff]
        %v533 = vld [vmem:[#allocation8 + $0x8] sm:$0xff]
        %v534 = vld [vmem:[#allocation8 + $0x10] sm:$0xff]
        %v535 = vld [vmem:[#allocation8 + $0x18] sm:$0xff]
        %v536 = vld [vmem:[%s7] sm:$0x1]
        %v538 = vlaneseq
        %v539 = vshrl.u32 %v538, 7
        %v540 = vsub.s32 0, %v539
        %v541 = vrot.slane %v536, %v540
        %vm543 = vcmask 261120
        %v545 = vsel %vm543, %v531, 0
        %v548 = vsel %vm543, %v532, 0
        %v551 = vsel %vm543, %v533, 0
        %v554 = vsel %vm543, %v534, 0
        %v557 = vsel %vm543, %v535, 0
        %559 = vmatprep.subr.mxu0 0.0
        %560 = vmatpush1.xpose.msra.mxu0 0.0
        %561 = vmatprep.subr.mxu0 0.0
        %562 = vmatpush1.xpose.msra.mxu0 0.0
        %563 = vmatprep.subr.mxu0 0.0
        %564 = vmatpush1.xpose.msra.mxu0 0.0
        %565 = vmatprep.subr.mxu0 0.0
        %566 = vmatpush1.xpose.msra.mxu0 0.0
        %567 = vmatprep.subr.mxu0 0.0
        %568 = vmatpush1.xpose.msra.mxu0 0.0
        %569 = vmatprep.subr.mxu0 0.0
        %570 = vmatpush1.xpose.msra.mxu0 0.0
        %571 = vmatprep.subr.mxu0 0.0
        %572 = vmatpush1.xpose.msra.mxu0 0.0
        %573 = vmatprep.subr.mxu0 0.0
        %574 = vmatpush1.xpose.msra.mxu0 0.0
        %575 = vmatprep.subr.mxu0 0.0
        %576 = vmatpush1.xpose.msra.mxu0 0.0
        %577 = vmatprep.subr.mxu0 0.0
        %578 = vmatpush1.xpose.msra.mxu0 0.0
        %579 = vmatprep.subr.mxu0 0.0
        %580 = vmatpush1.xpose.msra.mxu0 0.0
        %581 = vmatprep.subr.mxu0 0.0
        %582 = vmatpush1.xpose.msra.mxu0 0.0
        %583 = vmatprep.subr.mxu0 0.0
        %584 = vmatpush1.xpose.msra.mxu0 %v557
        %585 = vmatprep.subr.mxu0 0.0
        %586 = vmatpush1.xpose.msra.mxu0 %v554
        %587 = vmatprep.subr.mxu0 0.0
        %588 = vmatpush1.xpose.msra.mxu0 %v551
        %589 = vmatprep.subr.mxu0 0.0
        %590 = vmatpush1.xpose.msra.mxu0 %v548
        %591 = vmatprep.subr.mxu0 0.0
        %592 = vmatpush2.xpose.msra.mxu0 0.0
        %593 = vmatprep.subr.mxu0 0.0
        %594 = vmatpush2.xpose.msra.mxu0 0.0
        %595 = vmatprep.subr.mxu0 0.0
        %596 = vmatpush2.xpose.msra.mxu0 0.0
        %597 = vmatprep.subr.mxu0 0.0
        %598 = vmatpush2.xpose.msra.mxu0 0.0
        %599 = vmatprep.subr.mxu0 0.0
        %600 = vmatpush2.xpose.msra.mxu0 0.0
        %601 = vmatprep.subr.mxu0 0.0
        %602 = vmatpush2.xpose.msra.mxu0 0.0
        %603 = vmatprep.subr.mxu0 0.0
        %604 = vmatpush2.xpose.msra.mxu0 0.0
        %605 = vmatprep.subr.mxu0 0.0
        %606 = vmatpush2.xpose.msra.mxu0 0.0
        %607 = vmatprep.subr.mxu0 0.0
        %608 = vmatpush2.xpose.msra.mxu0 0.0
        %609 = vmatprep.subr.mxu0 0.0
        %610 = vmatpush2.xpose.msra.mxu0 0.0
        %611 = vmatprep.subr.mxu0 0.0
        %612 = vmatpush2.xpose.msra.mxu0 0.0
        %613 = vmatprep.subr.mxu0 0.0
        %614 = vmatpush2.xpose.msra.mxu0 0.0
        %615 = vmatprep.subr.mxu0 0.0
        %616 = vmatpush2.xpose.msra.mxu0 0.0
        %617 = vmatprep.subr.mxu0 0.0
        %618 = vmatpush2.xpose.msra.mxu0 0.0
        %619 = vmatprep.subr.mxu0 0.0
        %620 = vmatpush2.xpose.msra.mxu0 0.0
        %621 = vmatprep.subr.mxu0 0.0
        %622 = vmatpush2.xpose.msra.mxu0 0.0
        %623 = vmatprep.mubr.f32.mxu0 0.0
        %624 = vmatmul.mubr.f32.gmra.mxu0 %v545
        %v625 = vpop.f32.mrf.mxu0
        %v626 = vadd.f32 %v541, %v625
        %v627 = vpop.f32.mrf.mxu0
        %628 = vdwg.mxu0
        %v629 = vld [vmem:[%s457] sm:$0xff]
        %v630 = vld [vmem:[#allocation10] sm:$0xff]
        %v631 = vld [vmem:[#allocation10 + $0x8] sm:$0xff]
        %v632 = vld [vmem:[#allocation10 + $0x10] sm:$0xff]
        %v633 = vld [vmem:[#allocation10 + $0x18] sm:$0xff]
        %v634 = vld [vmem:[%s8] sm:$0x1]
        %v636 = vlaneseq
        %v637 = vshrl.u32 %v636, 7
        %v638 = vsub.s32 0, %v637
        %v639 = vrot.slane %v634, %v638
        %v642 = vsel %vm543, %v629, 0
        %v645 = vsel %vm543, %v630, 0
        %v648 = vsel %vm543, %v631, 0
        %v651 = vsel %vm543, %v632, 0
        %v654 = vsel %vm543, %v633, 0
        %656 = vmatprep.subr.mxu0 0.0
        %657 = vmatpush1.xpose.msra.mxu0 0.0
        %658 = vmatprep.subr.mxu0 0.0
        %659 = vmatpush1.xpose.msra.mxu0 0.0
        %660 = vmatprep.subr.mxu0 0.0
        %661 = vmatpush1.xpose.msra.mxu0 0.0
        %662 = vmatprep.subr.mxu0 0.0
        %663 = vmatpush1.xpose.msra.mxu0 0.0
        %664 = vmatprep.subr.mxu0 0.0
        %665 = vmatpush1.xpose.msra.mxu0 0.0
        %666 = vmatprep.subr.mxu0 0.0
        %667 = vmatpush1.xpose.msra.mxu0 0.0
        %668 = vmatprep.subr.mxu0 0.0
        %669 = vmatpush1.xpose.msra.mxu0 0.0
        %670 = vmatprep.subr.mxu0 0.0
        %671 = vmatpush1.xpose.msra.mxu0 0.0
        %672 = vmatprep.subr.mxu0 0.0
        %673 = vmatpush1.xpose.msra.mxu0 0.0
        %674 = vmatprep.subr.mxu0 0.0
        %675 = vmatpush1.xpose.msra.mxu0 0.0
        %676 = vmatprep.subr.mxu0 0.0
        %677 = vmatpush1.xpose.msra.mxu0 0.0
        %678 = vmatprep.subr.mxu0 0.0
        %679 = vmatpush1.xpose.msra.mxu0 0.0
        %680 = vmatprep.subr.mxu0 0.0
        %681 = vmatpush1.xpose.msra.mxu0 %v654
        %682 = vmatprep.subr.mxu0 0.0
        %683 = vmatpush1.xpose.msra.mxu0 %v651
        %684 = vmatprep.subr.mxu0 0.0
        %685 = vmatpush1.xpose.msra.mxu0 %v648
        %686 = vmatprep.subr.mxu0 0.0
        %687 = vmatpush1.xpose.msra.mxu0 %v645
        %688 = vmatprep.subr.mxu0 0.0
        %689 = vmatpush2.xpose.msra.mxu0 0.0
        %690 = vmatprep.subr.mxu0 0.0
        %691 = vmatpush2.xpose.msra.mxu0 0.0
        %692 = vmatprep.subr.mxu0 0.0
        %693 = vmatpush2.xpose.msra.mxu0 0.0
        %694 = vmatprep.subr.mxu0 0.0
        %695 = vmatpush2.xpose.msra.mxu0 0.0
        %696 = vmatprep.subr.mxu0 0.0
        %697 = vmatpush2.xpose.msra.mxu0 0.0
        %698 = vmatprep.subr.mxu0 0.0
        %699 = vmatpush2.xpose.msra.mxu0 0.0
        %700 = vmatprep.subr.mxu0 0.0
        %701 = vmatpush2.xpose.msra.mxu0 0.0
        %702 = vmatprep.subr.mxu0 0.0
        %703 = vmatpush2.xpose.msra.mxu0 0.0
        %704 = vmatprep.subr.mxu0 0.0
        %705 = vmatpush2.xpose.msra.mxu0 0.0
        %706 = vmatprep.subr.mxu0 0.0
        %707 = vmatpush2.xpose.msra.mxu0 0.0
        %708 = vmatprep.subr.mxu0 0.0
        %709 = vmatpush2.xpose.msra.mxu0 0.0
        %710 = vmatprep.subr.mxu0 0.0
        %711 = vmatpush2.xpose.msra.mxu0 0.0
        %712 = vmatprep.subr.mxu0 0.0
        %713 = vmatpush2.xpose.msra.mxu0 0.0
        %714 = vmatprep.subr.mxu0 0.0
        %715 = vmatpush2.xpose.msra.mxu0 0.0
        %716 = vmatprep.subr.mxu0 0.0
        %717 = vmatpush2.xpose.msra.mxu0 0.0
        %718 = vmatprep.subr.mxu0 0.0
        %719 = vmatpush2.xpose.msra.mxu0 0.0
        %720 = vmatprep.mubr.f32.mxu0 0.0
        %721 = vmatmul.mubr.f32.gmra.mxu0 %v642
        %v722 = vpop.f32.mrf.mxu0
        %v723 = vadd.f32 %v639, %v722
        %v724 = vpop.f32.mrf.mxu0
        %725 = vdwg.mxu0
        %v726 = vld [vmem:[%s466] sm:$0xff]
        %v727 = vld [vmem:[#allocation11] sm:$0xff]
        %v728 = vld [vmem:[#allocation11 + $0x8] sm:$0xff]
        %v729 = vld [vmem:[#allocation11 + $0x10] sm:$0xff]
        %v730 = vld [vmem:[#allocation11 + $0x18] sm:$0xff]
        %v731 = vld [vmem:[%s9] sm:$0x1]
        %v733 = vlaneseq
        %v734 = vshrl.u32 %v733, 7
        %v735 = vsub.s32 0, %v734
        %v736 = vrot.slane %v731, %v735
        %v739 = vsel %vm543, %v726, 0
        %v742 = vsel %vm543, %v727, 0
        %v745 = vsel %vm543, %v728, 0
        %v748 = vsel %vm543, %v729, 0
        %v751 = vsel %vm543, %v730, 0
        %753 = vmatprep.subr.mxu0 0.0
        %754 = vmatpush1.xpose.msra.mxu0 0.0
        %755 = vmatprep.subr.mxu0 0.0
        %756 = vmatpush1.xpose.msra.mxu0 0.0
        %757 = vmatprep.subr.mxu0 0.0
        %758 = vmatpush1.xpose.msra.mxu0 0.0
        %759 = vmatprep.subr.mxu0 0.0
        %760 = vmatpush1.xpose.msra.mxu0 0.0
        %761 = vmatprep.subr.mxu0 0.0
        %762 = vmatpush1.xpose.msra.mxu0 0.0
        %763 = vmatprep.subr.mxu0 0.0
        %764 = vmatpush1.xpose.msra.mxu0 0.0
        %765 = vmatprep.subr.mxu0 0.0
        %766 = vmatpush1.xpose.msra.mxu0 0.0
        %767 = vmatprep.subr.mxu0 0.0
        %768 = vmatpush1.xpose.msra.mxu0 0.0
        %769 = vmatprep.subr.mxu0 0.0
        %770 = vmatpush1.xpose.msra.mxu0 0.0
        %771 = vmatprep.subr.mxu0 0.0
        %772 = vmatpush1.xpose.msra.mxu0 0.0
        %773 = vmatprep.subr.mxu0 0.0
        %774 = vmatpush1.xpose.msra.mxu0 0.0
        %775 = vmatprep.subr.mxu0 0.0
        %776 = vmatpush1.xpose.msra.mxu0 0.0
        %777 = vmatprep.subr.mxu0 0.0
        %778 = vmatpush1.xpose.msra.mxu0 %v751
        %779 = vmatprep.subr.mxu0 0.0
        %780 = vmatpush1.xpose.msra.mxu0 %v748
        %781 = vmatprep.subr.mxu0 0.0
        %782 = vmatpush1.xpose.msra.mxu0 %v745
        %783 = vmatprep.subr.mxu0 0.0
        %784 = vmatpush1.xpose.msra.mxu0 %v742
        %785 = vmatprep.subr.mxu0 0.0
        %786 = vmatpush2.xpose.msra.mxu0 0.0
        %787 = vmatprep.subr.mxu0 0.0
        %788 = vmatpush2.xpose.msra.mxu0 0.0
        %789 = vmatprep.subr.mxu0 0.0
        %790 = vmatpush2.xpose.msra.mxu0 0.0
        %791 = vmatprep.subr.mxu0 0.0
        %792 = vmatpush2.xpose.msra.mxu0 0.0
        %793 = vmatprep.subr.mxu0 0.0
        %794 = vmatpush2.xpose.msra.mxu0 0.0
        %795 = vmatprep.subr.mxu0 0.0
        %796 = vmatpush2.xpose.msra.mxu0 0.0
        %797 = vmatprep.subr.mxu0 0.0
        %798 = vmatpush2.xpose.msra.mxu0 0.0
        %799 = vmatprep.subr.mxu0 0.0
        %800 = vmatpush2.xpose.msra.mxu0 0.0
        %801 = vmatprep.subr.mxu0 0.0
        %802 = vmatpush2.xpose.msra.mxu0 0.0
        %803 = vmatprep.subr.mxu0 0.0
        %804 = vmatpush2.xpose.msra.mxu0 0.0
        %805 = vmatprep.subr.mxu0 0.0
        %806 = vmatpush2.xpose.msra.mxu0 0.0
        %807 = vmatprep.subr.mxu0 0.0
        %808 = vmatpush2.xpose.msra.mxu0 0.0
        %809 = vmatprep.subr.mxu0 0.0
        %810 = vmatpush2.xpose.msra.mxu0 0.0
        %811 = vmatprep.subr.mxu0 0.0
        %812 = vmatpush2.xpose.msra.mxu0 0.0
        %813 = vmatprep.subr.mxu0 0.0
        %814 = vmatpush2.xpose.msra.mxu0 0.0
        %815 = vmatprep.subr.mxu0 0.0
        %816 = vmatpush2.xpose.msra.mxu0 0.0
        %817 = vmatprep.mubr.f32.mxu0 0.0
        %818 = vmatmul.mubr.f32.gmra.mxu0 %v739
        %v819 = vpop.f32.mrf.mxu0
        %v820 = vadd.f32 %v736, %v819
        %v821 = vpop.f32.mrf.mxu0
        %822 = vdwg.mxu0
        %v823 = vlaneseq
        %v824 = vshrl.u32 %v823, 7
        %v825 = vsub.s32 0, %v824
        %v826 = vrot.slane %v626, %v825
        %828 = vbcast.lane.b32.xlu0 %v826, 256
        %v829 = vpop.permute.xlu0 %828
        %v830 = vlaneseq
        %v831 = vshrl.u32 %v830, 7
        %v832 = vsub.s32 1, %v831
        %v833 = vrot.slane %v626, %v832
        %835 = vbcast.lane.b32.xlu0 %v833, 256
        %v836 = vpop.permute.xlu0 %835
        %v837 = vlaneseq
        %v838 = vshrl.u32 %v837, 7
        %v839 = vsub.s32 2, %v838
        %v840 = vrot.slane %v626, %v839
        %842 = vbcast.lane.b32.xlu0 %v840, 256
        %v843 = vpop.permute.xlu0 %842
        %v844 = vlaneseq
        %v845 = vshrl.u32 %v844, 7
        %v846 = vsub.s32 3, %v845
        %v847 = vrot.slane %v626, %v846
        %849 = vbcast.lane.b32.xlu0 %v847, 256
        %v850 = vpop.permute.xlu0 %849
        %v851 = vlaneseq
        %v852 = vshrl.u32 %v851, 7
        %v853 = vsub.s32 4, %v852
        %v854 = vrot.slane %v626, %v853
        %856 = vbcast.lane.b32.xlu0 %v854, 256
        %v857 = vpop.permute.xlu0 %856
        %v858 = vlaneseq
        %v859 = vshrl.u32 %v858, 7
        %v860 = vsub.s32 5, %v859
        %v861 = vrot.slane %v626, %v860
        %863 = vbcast.lane.b32.xlu0 %v861, 256
        %v864 = vpop.permute.xlu0 %863
        %v865 = vlaneseq
        %v866 = vshrl.u32 %v865, 7
        %v867 = vsub.s32 6, %v866
        %v868 = vrot.slane %v626, %v867
        %870 = vbcast.lane.b32.xlu0 %v868, 256
        %v871 = vpop.permute.xlu0 %870
        %v872 = vlaneseq
        %v873 = vshrl.u32 %v872, 7
        %v874 = vsub.s32 7, %v873
        %v875 = vrot.slane %v626, %v874
        %877 = vbcast.lane.b32.xlu0 %v875, 256
        %v878 = vpop.permute.xlu0 %877
        %v880 = vcombine.high %v723, %v723
        %v882 = vunpack.c.l.s4 1966171168
        %v883 = vunpack.c.0.s8 %v882
        %v884 = vlaneseq
        %v885 = vshrl.u32 %v884, 7
        %v886 = vsub.s32 %v883, %v885
        %v887 = vrot.slane %v723, %v886
        %v889 = vunpack.c.l.s4 1966171168
        %v890 = vunpack.c.0.s8 %v889
        %v891 = vlaneseq
        %v892 = vshrl.u32 %v891, 7
        %v893 = vsub.s32 %v890, %v892
        %v894 = vrot.slane %v880, %v893
        %v895 = vcombine.high %v887, %v887
        %v896 = vcombine.high %v894, %v894
        %v898 = vunpack.c.l.s4 1966171168
        %v899 = vunpack.c.0.s8 %v898
        %v900 = vlaneseq
        %v901 = vshrl.u32 %v900, 7
        %v902 = vsub.s32 %v899, %v901
        %v903 = vrot.slane %v887, %v902
        %v905 = vunpack.c.l.s4 1966171168
        %v906 = vunpack.c.0.s8 %v905
        %v907 = vlaneseq
        %v908 = vshrl.u32 %v907, 7
        %v909 = vsub.s32 %v906, %v908
        %v910 = vrot.slane %v894, %v909
        %v912 = vunpack.c.l.s4 1966171168
        %v913 = vunpack.c.0.s8 %v912
        %v914 = vlaneseq
        %v915 = vshrl.u32 %v914, 7
        %v916 = vsub.s32 %v913, %v915
        %v917 = vrot.slane %v895, %v916
        %v919 = vunpack.c.l.s4 1966171168
        %v920 = vunpack.c.0.s8 %v919
        %v921 = vlaneseq
        %v922 = vshrl.u32 %v921, 7
        %v923 = vsub.s32 %v920, %v922
        %v924 = vrot.slane %v896, %v923
        %v925 = vcombine.high %v903, %v903
        %v926 = vcombine.high %v910, %v910
        %v927 = vcombine.high %v917, %v917
        %v928 = vcombine.high %v924, %v924
        %v929 = vlaneseq
        %v930 = vshrl.u32 %v929, 7
        %v931 = vsub.s32 0, %v930
        %v932 = vrot.slane %v903, %v931
        %v933 = vlaneseq
        %v934 = vshrl.u32 %v933, 7
        %v935 = vsub.s32 0, %v934
        %v936 = vrot.slane %v917, %v935
        %v937 = vlaneseq
        %v938 = vshrl.u32 %v937, 7
        %v939 = vsub.s32 0, %v938
        %v940 = vrot.slane %v925, %v939
        %v941 = vlaneseq
        %v942 = vshrl.u32 %v941, 7
        %v943 = vsub.s32 0, %v942
        %v944 = vrot.slane %v927, %v943
        %v945 = vlaneseq
        %v946 = vshrl.u32 %v945, 7
        %v947 = vsub.s32 0, %v946
        %v948 = vrot.slane %v910, %v947
        %v949 = vlaneseq
        %v950 = vshrl.u32 %v949, 7
        %v951 = vsub.s32 0, %v950
        %v952 = vrot.slane %v924, %v951
        %v953 = vlaneseq
        %v954 = vshrl.u32 %v953, 7
        %v955 = vsub.s32 0, %v954
        %v956 = vrot.slane %v926, %v955
        %v957 = vlaneseq
        %v958 = vshrl.u32 %v957, 7
        %v959 = vsub.s32 0, %v958
        %v960 = vrot.slane %v928, %v959
        %v969 = vmul.f32 %v829, %v932
        %v970 = vmul.f32 %v836, %v936
        %v971 = vmul.f32 %v843, %v940
        %v972 = vmul.f32 %v850, %v944
        %v973 = vmul.f32 %v857, %v948
        %v974 = vmul.f32 %v864, %v952
        %v975 = vmul.f32 %v871, %v956
        %v976 = vmul.f32 %v878, %v960
        %s978 = sor.u32 256, 8
        %979 = vbcast.lane.b32.xlu0 %v826, %s978
        %v980 = vpop.permute.xlu0 %979
        %s982 = sor.u32 256, 8
        %983 = vbcast.lane.b32.xlu0 %v833, %s982
        %v984 = vpop.permute.xlu0 %983
        %s986 = sor.u32 256, 8
        %987 = vbcast.lane.b32.xlu0 %v840, %s986
        %v988 = vpop.permute.xlu0 %987
        %s990 = sor.u32 256, 8
        %991 = vbcast.lane.b32.xlu0 %v847, %s990
        %v992 = vpop.permute.xlu0 %991
        %s994 = sor.u32 256, 8
        %995 = vbcast.lane.b32.xlu0 %v854, %s994
        %v996 = vpop.permute.xlu0 %995
        %s998 = sor.u32 256, 8
        %999 = vbcast.lane.b32.xlu0 %v861, %s998
        %v1000 = vpop.permute.xlu0 %999
        %s1002 = sor.u32 256, 8
        %1003 = vbcast.lane.b32.xlu0 %v868, %s1002
        %v1004 = vpop.permute.xlu0 %1003
        %s1006 = sor.u32 256, 8
        %1007 = vbcast.lane.b32.xlu0 %v875, %s1006
        %v1008 = vpop.permute.xlu0 %1007
        %v1009 = vmul.f32 %v980, %v932
        %v1010 = vmul.f32 %v984, %v936
        %v1011 = vmul.f32 %v988, %v940
        %v1012 = vmul.f32 %v992, %v944
        %v1013 = vmul.f32 %v996, %v948
        %v1014 = vmul.f32 %v1000, %v952
        %v1015 = vmul.f32 %v1004, %v956
        %v1016 = vmul.f32 %v1008, %v960
        %1025 = vrot.lane.b32.xlu0 %v1009, 120
        %v1026 = vpop.permute.xlu0 %1025
        %1027 = vrot.lane.b32.xlu0 %v1010, 120
        %v1028 = vpop.permute.xlu0 %1027
        %1029 = vrot.lane.b32.xlu0 %v1011, 120
        %v1030 = vpop.permute.xlu0 %1029
        %1031 = vrot.lane.b32.xlu0 %v1012, 120
        %v1032 = vpop.permute.xlu0 %1031
        %1033 = vrot.lane.b32.xlu0 %v1013, 120
        %v1034 = vpop.permute.xlu0 %1033
        %1035 = vrot.lane.b32.xlu0 %v1014, 120
        %v1036 = vpop.permute.xlu0 %1035
        %1037 = vrot.lane.b32.xlu0 %v1015, 120
        %v1038 = vpop.permute.xlu0 %1037
        %1039 = vrot.lane.b32.xlu0 %v1016, 120
        %v1040 = vpop.permute.xlu0 %1039
        %v1049 = vadd.f32 %v969, %v1026
        %v1050 = vadd.f32 %v970, %v1028
        %v1051 = vadd.f32 %v971, %v1030
        %v1052 = vadd.f32 %v972, %v1032
        %v1053 = vadd.f32 %v973, %v1034
        %v1054 = vadd.f32 %v974, %v1036
        %v1055 = vadd.f32 %v975, %v1038
        %v1056 = vadd.f32 %v976, %v1040
        %s1058 = sor.u32 256, 16
        %1059 = vbcast.lane.b32.xlu0 %v826, %s1058
        %v1060 = vpop.permute.xlu0 %1059
        %s1062 = sor.u32 256, 16
        %1063 = vbcast.lane.b32.xlu0 %v833, %s1062
        %v1064 = vpop.permute.xlu0 %1063
        %s1066 = sor.u32 256, 16
        %1067 = vbcast.lane.b32.xlu0 %v840, %s1066
        %v1068 = vpop.permute.xlu0 %1067
        %s1070 = sor.u32 256, 16
        %1071 = vbcast.lane.b32.xlu0 %v847, %s1070
        %v1072 = vpop.permute.xlu0 %1071
        %s1074 = sor.u32 256, 16
        %1075 = vbcast.lane.b32.xlu0 %v854, %s1074
        %v1076 = vpop.permute.xlu0 %1075
        %s1078 = sor.u32 256, 16
        %1079 = vbcast.lane.b32.xlu0 %v861, %s1078
        %v1080 = vpop.permute.xlu0 %1079
        %s1082 = sor.u32 256, 16
        %1083 = vbcast.lane.b32.xlu0 %v868, %s1082
        %v1084 = vpop.permute.xlu0 %1083
        %s1086 = sor.u32 256, 16
        %1087 = vbcast.lane.b32.xlu0 %v875, %s1086
        %v1088 = vpop.permute.xlu0 %1087
        %v1089 = vmul.f32 %v1060, %v932
        %v1090 = vmul.f32 %v1064, %v936
        %v1091 = vmul.f32 %v1068, %v940
        %v1092 = vmul.f32 %v1072, %v944
        %v1093 = vmul.f32 %v1076, %v948
        %v1094 = vmul.f32 %v1080, %v952
        %v1095 = vmul.f32 %v1084, %v956
        %v1096 = vmul.f32 %v1088, %v960
        %1105 = vrot.lane.b32.xlu0 %v1089, 112
        %v1106 = vpop.permute.xlu0 %1105
        %1107 = vrot.lane.b32.xlu0 %v1090, 112
        %v1108 = vpop.permute.xlu0 %1107
        %1109 = vrot.lane.b32.xlu0 %v1091, 112
        %v1110 = vpop.permute.xlu0 %1109
        %1111 = vrot.lane.b32.xlu0 %v1092, 112
        %v1112 = vpop.permute.xlu0 %1111
        %1113 = vrot.lane.b32.xlu0 %v1093, 112
        %v1114 = vpop.permute.xlu0 %1113
        %1115 = vrot.lane.b32.xlu0 %v1094, 112
        %v1116 = vpop.permute.xlu0 %1115
        %1117 = vrot.lane.b32.xlu0 %v1095, 112
        %v1118 = vpop.permute.xlu0 %1117
        %1119 = vrot.lane.b32.xlu0 %v1096, 112
        %v1120 = vpop.permute.xlu0 %1119
        %v1129 = vadd.f32 %v1049, %v1106
        %v1130 = vadd.f32 %v1050, %v1108
        %v1131 = vadd.f32 %v1051, %v1110
        %v1132 = vadd.f32 %v1052, %v1112
        %v1133 = vadd.f32 %v1053, %v1114
        %v1134 = vadd.f32 %v1054, %v1116
        %v1135 = vadd.f32 %v1055, %v1118
        %v1136 = vadd.f32 %v1056, %v1120
        %s1138 = sor.u32 256, 24
        %1139 = vbcast.lane.b32.xlu0 %v826, %s1138
        %v1140 = vpop.permute.xlu0 %1139
        %s1142 = sor.u32 256, 24
        %1143 = vbcast.lane.b32.xlu0 %v833, %s1142
        %v1144 = vpop.permute.xlu0 %1143
        %s1146 = sor.u32 256, 24
        %1147 = vbcast.lane.b32.xlu0 %v840, %s1146
        %v1148 = vpop.permute.xlu0 %1147
        %s1150 = sor.u32 256, 24
        %1151 = vbcast.lane.b32.xlu0 %v847, %s1150
        %v1152 = vpop.permute.xlu0 %1151
        %s1154 = sor.u32 256, 24
        %1155 = vbcast.lane.b32.xlu0 %v854, %s1154
        %v1156 = vpop.permute.xlu0 %1155
        %s1158 = sor.u32 256, 24
        %1159 = vbcast.lane.b32.xlu0 %v861, %s1158
        %v1160 = vpop.permute.xlu0 %1159
        %s1162 = sor.u32 256, 24
        %1163 = vbcast.lane.b32.xlu0 %v868, %s1162
        %v1164 = vpop.permute.xlu0 %1163
        %s1166 = sor.u32 256, 24
        %1167 = vbcast.lane.b32.xlu0 %v875, %s1166
        %v1168 = vpop.permute.xlu0 %1167
        %v1169 = vmul.f32 %v1140, %v932
        %v1170 = vmul.f32 %v1144, %v936
        %v1171 = vmul.f32 %v1148, %v940
        %v1172 = vmul.f32 %v1152, %v944
        %v1173 = vmul.f32 %v1156, %v948
        %v1174 = vmul.f32 %v1160, %v952
        %v1175 = vmul.f32 %v1164, %v956
        %v1176 = vmul.f32 %v1168, %v960
        %1185 = vrot.lane.b32.xlu0 %v1169, 104
        %v1186 = vpop.permute.xlu0 %1185
        %1187 = vrot.lane.b32.xlu0 %v1170, 104
        %v1188 = vpop.permute.xlu0 %1187
        %1189 = vrot.lane.b32.xlu0 %v1171, 104
        %v1190 = vpop.permute.xlu0 %1189
        %1191 = vrot.lane.b32.xlu0 %v1172, 104
        %v1192 = vpop.permute.xlu0 %1191
        %1193 = vrot.lane.b32.xlu0 %v1173, 104
        %v1194 = vpop.permute.xlu0 %1193
        %1195 = vrot.lane.b32.xlu0 %v1174, 104
        %v1196 = vpop.permute.xlu0 %1195
        %1197 = vrot.lane.b32.xlu0 %v1175, 104
        %v1198 = vpop.permute.xlu0 %1197
        %1199 = vrot.lane.b32.xlu0 %v1176, 104
        %v1200 = vpop.permute.xlu0 %1199
        %v1209 = vadd.f32 %v1129, %v1186
        %v1210 = vadd.f32 %v1130, %v1188
        %v1211 = vadd.f32 %v1131, %v1190
        %v1212 = vadd.f32 %v1132, %v1192
        %v1213 = vadd.f32 %v1133, %v1194
        %v1214 = vadd.f32 %v1134, %v1196
        %v1215 = vadd.f32 %v1135, %v1198
        %v1216 = vadd.f32 %v1136, %v1200
        %v1217 = vmul.f32 %v1209, 0.5
        %v1218 = vmul.f32 %v1210, 0.5
        %v1219 = vmul.f32 %v1211, 0.5
        %v1220 = vmul.f32 %v1212, 0.5
        %v1221 = vmul.f32 %v1213, 0.5
        %v1222 = vmul.f32 %v1214, 0.5
        %v1223 = vmul.f32 %v1215, 0.5
        %v1224 = vmul.f32 %v1216, 0.5
        %vm1225 = vcmask 64512
        %v1226 = vsel %vm1225, %v1217, -inf
        %1227 = vmax.xlane.f32.xlu0 %v1226
        %v1228 = vpop.xlane.xlu0 %1227
        %v1229 = vsel %vm1225, %v1218, -inf
        %1230 = vmax.xlane.f32.xlu0 %v1229
        %v1231 = vpop.xlane.xlu0 %1230
        %v1232 = vsel %vm1225, %v1219, -inf
        %1233 = vmax.xlane.f32.xlu0 %v1232
        %v1234 = vpop.xlane.xlu0 %1233
        %v1235 = vsel %vm1225, %v1220, -inf
        %1236 = vmax.xlane.f32.xlu0 %v1235
        %v1237 = vpop.xlane.xlu0 %1236
        %v1238 = vsel %vm1225, %v1221, -inf
        %1239 = vmax.xlane.f32.xlu0 %v1238
        %v1240 = vpop.xlane.xlu0 %1239
        %v1241 = vsel %vm1225, %v1222, -inf
        %1242 = vmax.xlane.f32.xlu0 %v1241
        %v1243 = vpop.xlane.xlu0 %1242
        %v1244 = vsel %vm1225, %v1223, -inf
        %1245 = vmax.xlane.f32.xlu0 %v1244
        %v1246 = vpop.xlane.xlu0 %1245
        %v1247 = vsel %vm1225, %v1224, -inf
        %1248 = vmax.xlane.f32.xlu0 %v1247
        %v1249 = vpop.xlane.xlu0 %1248
        %v1250 = vsub.f32 %v1217, %v1228
        %v1251 = vsub.f32 %v1218, %v1231
        %v1252 = vsub.f32 %v1219, %v1234
        %v1253 = vsub.f32 %v1220, %v1237
        %v1254 = vsub.f32 %v1221, %v1240
        %v1255 = vsub.f32 %v1222, %v1243
        %v1256 = vsub.f32 %v1223, %v1246
        %v1257 = vsub.f32 %v1224, %v1249
        %v1258 = vmul.f32 %v1250, 1.442695
        %v1259 = vpow.pop %v1258
        %v1260 = vmul.f32 %v1251, 1.442695
        %v1261 = vpow.pop %v1260
        %v1262 = vmul.f32 %v1252, 1.442695
        %v1263 = vpow.pop %v1262
        %v1264 = vmul.f32 %v1253, 1.442695
        %v1265 = vpow.pop %v1264
        %v1266 = vmul.f32 %v1254, 1.442695
        %v1267 = vpow.pop %v1266
        %v1268 = vmul.f32 %v1255, 1.442695
        %v1269 = vpow.pop %v1268
        %v1270 = vmul.f32 %v1256, 1.442695
        %v1271 = vpow.pop %v1270
        %v1272 = vmul.f32 %v1257, 1.442695
        %v1273 = vpow.pop %v1272
        %v1274 = vsel %vm1225, %v1259, 0.0
        %1275 = vadd.xlane.f32.xlu0 %v1274
        %v1276 = vpop.xlane.xlu0 %1275
        %v1277 = vsel %vm1225, %v1261, 0.0
        %1278 = vadd.xlane.f32.xlu0 %v1277
        %v1279 = vpop.xlane.xlu0 %1278
        %v1280 = vsel %vm1225, %v1263, 0.0
        %1281 = vadd.xlane.f32.xlu0 %v1280
        %v1282 = vpop.xlane.xlu0 %1281
        %v1283 = vsel %vm1225, %v1265, 0.0
        %1284 = vadd.xlane.f32.xlu0 %v1283
        %v1285 = vpop.xlane.xlu0 %1284
        %v1286 = vsel %vm1225, %v1267, 0.0
        %1287 = vadd.xlane.f32.xlu0 %v1286
        %v1288 = vpop.xlane.xlu0 %1287
        %v1289 = vsel %vm1225, %v1269, 0.0
        %1290 = vadd.xlane.f32.xlu0 %v1289
        %v1291 = vpop.xlane.xlu0 %1290
        %v1292 = vsel %vm1225, %v1271, 0.0
        %1293 = vadd.xlane.f32.xlu0 %v1292
        %v1294 = vpop.xlane.xlu0 %1293
        %v1295 = vsel %vm1225, %v1273, 0.0
        %1296 = vadd.xlane.f32.xlu0 %v1295
        %v1297 = vpop.xlane.xlu0 %1296
        %v1298 = vrcp.pop %v1276
        %v1299 = vrcp.pop %v1279
        %v1300 = vrcp.pop %v1282
        %v1301 = vrcp.pop %v1285
        %v1302 = vrcp.pop %v1288
        %v1303 = vrcp.pop %v1291
        %v1304 = vrcp.pop %v1294
        %v1305 = vrcp.pop %v1297
        %v1306 = vmul.f32 %v1259, %v1298
        %v1307 = vmul.f32 %v1261, %v1299
        %v1308 = vmul.f32 %v1263, %v1300
        %v1309 = vmul.f32 %v1265, %v1301
        %v1310 = vmul.f32 %v1267, %v1302
        %v1311 = vmul.f32 %v1269, %v1303
        %v1312 = vmul.f32 %v1271, %v1304
        %v1313 = vmul.f32 %v1273, %v1305
        %v1315 = vcombine.high %v820, %v820
        %v1317 = vunpack.c.l.s4 1966171168
        %v1318 = vunpack.c.0.s8 %v1317
        %v1319 = vlaneseq
        %v1320 = vshrl.u32 %v1319, 7
        %v1321 = vsub.s32 %v1318, %v1320
        %v1322 = vrot.slane %v820, %v1321
        %v1324 = vunpack.c.l.s4 1966171168
        %v1325 = vunpack.c.0.s8 %v1324
        %v1326 = vlaneseq
        %v1327 = vshrl.u32 %v1326, 7
        %v1328 = vsub.s32 %v1325, %v1327
        %v1329 = vrot.slane %v1315, %v1328
        %v1330 = vcombine.high %v1322, %v1322
        %v1331 = vcombine.high %v1329, %v1329
        %v1333 = vunpack.c.l.s4 1966171168
        %v1334 = vunpack.c.0.s8 %v1333
        %v1335 = vlaneseq
        %v1336 = vshrl.u32 %v1335, 7
        %v1337 = vsub.s32 %v1334, %v1336
        %v1338 = vrot.slane %v1322, %v1337
        %v1340 = vunpack.c.l.s4 1966171168
        %v1341 = vunpack.c.0.s8 %v1340
        %v1342 = vlaneseq
        %v1343 = vshrl.u32 %v1342, 7
        %v1344 = vsub.s32 %v1341, %v1343
        %v1345 = vrot.slane %v1329, %v1344
        %v1347 = vunpack.c.l.s4 1966171168
        %v1348 = vunpack.c.0.s8 %v1347
        %v1349 = vlaneseq
        %v1350 = vshrl.u32 %v1349, 7
        %v1351 = vsub.s32 %v1348, %v1350
        %v1352 = vrot.slane %v1330, %v1351
        %v1354 = vunpack.c.l.s4 1966171168
        %v1355 = vunpack.c.0.s8 %v1354
        %v1356 = vlaneseq
        %v1357 = vshrl.u32 %v1356, 7
        %v1358 = vsub.s32 %v1355, %v1357
        %v1359 = vrot.slane %v1331, %v1358
        %v1360 = vcombine.high %v1338, %v1338
        %v1361 = vcombine.high %v1345, %v1345
        %v1362 = vcombine.high %v1352, %v1352
        %v1363 = vcombine.high %v1359, %v1359
        %v1364 = vlaneseq
        %v1365 = vshrl.u32 %v1364, 7
        %v1366 = vsub.s32 0, %v1365
        %v1367 = vrot.slane %v1338, %v1366
        %v1368 = vlaneseq
        %v1369 = vshrl.u32 %v1368, 7
        %v1370 = vsub.s32 0, %v1369
        %v1371 = vrot.slane %v1352, %v1370
        %v1372 = vlaneseq
        %v1373 = vshrl.u32 %v1372, 7
        %v1374 = vsub.s32 0, %v1373
        %v1375 = vrot.slane %v1360, %v1374
        %v1376 = vlaneseq
        %v1377 = vshrl.u32 %v1376, 7
        %v1378 = vsub.s32 0, %v1377
        %v1379 = vrot.slane %v1362, %v1378
        %v1380 = vlaneseq
        %v1381 = vshrl.u32 %v1380, 7
        %v1382 = vsub.s32 0, %v1381
        %v1383 = vrot.slane %v1345, %v1382
        %v1384 = vlaneseq
        %v1385 = vshrl.u32 %v1384, 7
        %v1386 = vsub.s32 0, %v1385
        %v1387 = vrot.slane %v1359, %v1386
        %v1388 = vlaneseq
        %v1389 = vshrl.u32 %v1388, 7
        %v1390 = vsub.s32 0, %v1389
        %v1391 = vrot.slane %v1361, %v1390
        %v1392 = vlaneseq
        %v1393 = vshrl.u32 %v1392, 7
        %v1394 = vsub.s32 0, %v1393
        %v1395 = vrot.slane %v1363, %v1394
        %v1404 = vmul.f32 %v1306, %v1367
        %v1405 = vmul.f32 %v1307, %v1371
        %v1406 = vmul.f32 %v1308, %v1375
        %v1407 = vmul.f32 %v1309, %v1379
        %v1408 = vmul.f32 %v1310, %v1383
        %v1409 = vmul.f32 %v1311, %v1387
        %v1410 = vmul.f32 %v1312, %v1391
        %v1411 = vmul.f32 %v1313, %v1395
        %v1412 = vsel %vm1225, %v1404, 0.0
        %1413 = vadd.xlane.f32.xlu0 %v1412
        %v1414 = vpop.xlane.xlu0 %1413
        %v1415 = vsel %vm1225, %v1405, 0.0
        %1416 = vadd.xlane.f32.xlu0 %v1415
        %v1417 = vpop.xlane.xlu0 %1416
        %v1418 = vsel %vm1225, %v1406, 0.0
        %1419 = vadd.xlane.f32.xlu0 %v1418
        %v1420 = vpop.xlane.xlu0 %1419
        %v1421 = vsel %vm1225, %v1407, 0.0
        %1422 = vadd.xlane.f32.xlu0 %v1421
        %v1423 = vpop.xlane.xlu0 %1422
        %v1424 = vsel %vm1225, %v1408, 0.0
        %1425 = vadd.xlane.f32.xlu0 %v1424
        %v1426 = vpop.xlane.xlu0 %1425
        %v1427 = vsel %vm1225, %v1409, 0.0
        %1428 = vadd.xlane.f32.xlu0 %v1427
        %v1429 = vpop.xlane.xlu0 %1428
        %v1430 = vsel %vm1225, %v1410, 0.0
        %1431 = vadd.xlane.f32.xlu0 %v1430
        %v1432 = vpop.xlane.xlu0 %1431
        %v1433 = vsel %vm1225, %v1411, 0.0
        %1434 = vadd.xlane.f32.xlu0 %v1433
        %v1435 = vpop.xlane.xlu0 %1434
        %1436 = vrot.lane.b32.xlu0 %v1367, 120
        %v1437 = vpop.permute.xlu0 %1436
        %1438 = vrot.lane.b32.xlu0 %v1371, 120
        %v1439 = vpop.permute.xlu0 %1438
        %1440 = vrot.lane.b32.xlu0 %v1375, 120
        %v1441 = vpop.permute.xlu0 %1440
        %1442 = vrot.lane.b32.xlu0 %v1379, 120
        %v1443 = vpop.permute.xlu0 %1442
        %1444 = vrot.lane.b32.xlu0 %v1383, 120
        %v1445 = vpop.permute.xlu0 %1444
        %1446 = vrot.lane.b32.xlu0 %v1387, 120
        %v1447 = vpop.permute.xlu0 %1446
        %1448 = vrot.lane.b32.xlu0 %v1391, 120
        %v1449 = vpop.permute.xlu0 %1448
        %1450 = vrot.lane.b32.xlu0 %v1395, 120
        %v1451 = vpop.permute.xlu0 %1450
        %v1460 = vmul.f32 %v1306, %v1437
        %v1461 = vmul.f32 %v1307, %v1439
        %v1462 = vmul.f32 %v1308, %v1441
        %v1463 = vmul.f32 %v1309, %v1443
        %v1464 = vmul.f32 %v1310, %v1445
        %v1465 = vmul.f32 %v1311, %v1447
        %v1466 = vmul.f32 %v1312, %v1449
        %v1467 = vmul.f32 %v1313, %v1451
        %v1468 = vsel %vm1225, %v1460, 0.0
        %1469 = vadd.xlane.f32.xlu0 %v1468
        %v1470 = vpop.xlane.xlu0 %1469
        %v1471 = vsel %vm1225, %v1461, 0.0
        %1472 = vadd.xlane.f32.xlu0 %v1471
        %v1473 = vpop.xlane.xlu0 %1472
        %v1474 = vsel %vm1225, %v1462, 0.0
        %1475 = vadd.xlane.f32.xlu0 %v1474
        %v1476 = vpop.xlane.xlu0 %1475
        %v1477 = vsel %vm1225, %v1463, 0.0
        %1478 = vadd.xlane.f32.xlu0 %v1477
        %v1479 = vpop.xlane.xlu0 %1478
        %v1480 = vsel %vm1225, %v1464, 0.0
        %1481 = vadd.xlane.f32.xlu0 %v1480
        %v1482 = vpop.xlane.xlu0 %1481
        %v1483 = vsel %vm1225, %v1465, 0.0
        %1484 = vadd.xlane.f32.xlu0 %v1483
        %v1485 = vpop.xlane.xlu0 %1484
        %v1486 = vsel %vm1225, %v1466, 0.0
        %1487 = vadd.xlane.f32.xlu0 %v1486
        %v1488 = vpop.xlane.xlu0 %1487
        %v1489 = vsel %vm1225, %v1467, 0.0
        %1490 = vadd.xlane.f32.xlu0 %v1489
        %v1491 = vpop.xlane.xlu0 %1490
        %1492 = vrot.lane.b32.xlu0 %v1367, 112
        %v1493 = vpop.permute.xlu0 %1492
        %1494 = vrot.lane.b32.xlu0 %v1371, 112
        %v1495 = vpop.permute.xlu0 %1494
        %1496 = vrot.lane.b32.xlu0 %v1375, 112
        %v1497 = vpop.permute.xlu0 %1496
        %1498 = vrot.lane.b32.xlu0 %v1379, 112
        %v1499 = vpop.permute.xlu0 %1498
        %1500 = vrot.lane.b32.xlu0 %v1383, 112
        %v1501 = vpop.permute.xlu0 %1500
        %1502 = vrot.lane.b32.xlu0 %v1387, 112
        %v1503 = vpop.permute.xlu0 %1502
        %1504 = vrot.lane.b32.xlu0 %v1391, 112
        %v1505 = vpop.permute.xlu0 %1504
        %1506 = vrot.lane.b32.xlu0 %v1395, 112
        %v1507 = vpop.permute.xlu0 %1506
        %v1516 = vmul.f32 %v1306, %v1493
        %v1517 = vmul.f32 %v1307, %v1495
        %v1518 = vmul.f32 %v1308, %v1497
        %v1519 = vmul.f32 %v1309, %v1499
        %v1520 = vmul.f32 %v1310, %v1501
        %v1521 = vmul.f32 %v1311, %v1503
        %v1522 = vmul.f32 %v1312, %v1505
        %v1523 = vmul.f32 %v1313, %v1507
        %v1524 = vsel %vm1225, %v1516, 0.0
        %1525 = vadd.xlane.f32.xlu0 %v1524
        %v1526 = vpop.xlane.xlu0 %1525
        %v1527 = vsel %vm1225, %v1517, 0.0
        %1528 = vadd.xlane.f32.xlu0 %v1527
        %v1529 = vpop.xlane.xlu0 %1528
        %v1530 = vsel %vm1225, %v1518, 0.0
        %1531 = vadd.xlane.f32.xlu0 %v1530
        %v1532 = vpop.xlane.xlu0 %1531
        %v1533 = vsel %vm1225, %v1519, 0.0
        %1534 = vadd.xlane.f32.xlu0 %v1533
        %v1535 = vpop.xlane.xlu0 %1534
        %v1536 = vsel %vm1225, %v1520, 0.0
        %1537 = vadd.xlane.f32.xlu0 %v1536
        %v1538 = vpop.xlane.xlu0 %1537
        %v1539 = vsel %vm1225, %v1521, 0.0
        %1540 = vadd.xlane.f32.xlu0 %v1539
        %v1541 = vpop.xlane.xlu0 %1540
        %v1542 = vsel %vm1225, %v1522, 0.0
        %1543 = vadd.xlane.f32.xlu0 %v1542
        %v1544 = vpop.xlane.xlu0 %1543
        %v1545 = vsel %vm1225, %v1523, 0.0
        %1546 = vadd.xlane.f32.xlu0 %v1545
        %v1547 = vpop.xlane.xlu0 %1546
        %1548 = vrot.lane.b32.xlu0 %v1367, 104
        %v1549 = vpop.permute.xlu0 %1548
        %1550 = vrot.lane.b32.xlu0 %v1371, 104
        %v1551 = vpop.permute.xlu0 %1550
        %1552 = vrot.lane.b32.xlu0 %v1375, 104
        %v1553 = vpop.permute.xlu0 %1552
        %1554 = vrot.lane.b32.xlu0 %v1379, 104
        %v1555 = vpop.permute.xlu0 %1554
        %1556 = vrot.lane.b32.xlu0 %v1383, 104
        %v1557 = vpop.permute.xlu0 %1556
        %1558 = vrot.lane.b32.xlu0 %v1387, 104
        %v1559 = vpop.permute.xlu0 %1558
        %1560 = vrot.lane.b32.xlu0 %v1391, 104
        %v1561 = vpop.permute.xlu0 %1560
        %1562 = vrot.lane.b32.xlu0 %v1395, 104
        %v1563 = vpop.permute.xlu0 %1562
        %v1572 = vmul.f32 %v1306, %v1549
        %v1573 = vmul.f32 %v1307, %v1551
        %v1574 = vmul.f32 %v1308, %v1553
        %v1575 = vmul.f32 %v1309, %v1555
        %v1576 = vmul.f32 %v1310, %v1557
        %v1577 = vmul.f32 %v1311, %v1559
        %v1578 = vmul.f32 %v1312, %v1561
        %v1579 = vmul.f32 %v1313, %v1563
        %v1580 = vsel %vm1225, %v1572, 0.0
        %1581 = vadd.xlane.f32.xlu0 %v1580
        %v1582 = vpop.xlane.xlu0 %1581
        %v1583 = vsel %vm1225, %v1573, 0.0
        %1584 = vadd.xlane.f32.xlu0 %v1583
        %v1585 = vpop.xlane.xlu0 %1584
        %v1586 = vsel %vm1225, %v1574, 0.0
        %1587 = vadd.xlane.f32.xlu0 %v1586
        %v1588 = vpop.xlane.xlu0 %1587
        %v1589 = vsel %vm1225, %v1575, 0.0
        %1590 = vadd.xlane.f32.xlu0 %v1589
        %v1591 = vpop.xlane.xlu0 %1590
        %v1592 = vsel %vm1225, %v1576, 0.0
        %1593 = vadd.xlane.f32.xlu0 %v1592
        %v1594 = vpop.xlane.xlu0 %1593
        %v1595 = vsel %vm1225, %v1577, 0.0
        %1596 = vadd.xlane.f32.xlu0 %v1595
        %v1597 = vpop.xlane.xlu0 %1596
        %v1598 = vsel %vm1225, %v1578, 0.0
        %1599 = vadd.xlane.f32.xlu0 %v1598
        %v1600 = vpop.xlane.xlu0 %1599
        %v1601 = vsel %vm1225, %v1579, 0.0
        %1602 = vadd.xlane.f32.xlu0 %v1601
        %v1603 = vpop.xlane.xlu0 %1602
        %v1612 = vlaneseq
        %v1613 = vand.u32 %v1612, 127
        %v1614 = vlaneseq
        %v1615 = vshrl.u32 %v1614, 7
        %v1616 = vsub.s32 %v1613, %v1615
        %v1617 = vrot.slane %v1414, %v1616
        %v1618 = vlaneseq
        %v1619 = vshrl.u32 %v1618, 7
        %v1620 = vsub.s32 %v1613, %v1619
        %v1621 = vrot.slane %v1417, %v1620
        %v1622 = vlaneseq
        %v1623 = vshrl.u32 %v1622, 7
        %v1624 = vsub.s32 %v1613, %v1623
        %v1625 = vrot.slane %v1420, %v1624
        %v1626 = vlaneseq
        %v1627 = vshrl.u32 %v1626, 7
        %v1628 = vsub.s32 %v1613, %v1627
        %v1629 = vrot.slane %v1423, %v1628
        %v1630 = vlaneseq
        %v1631 = vshrl.u32 %v1630, 7
        %v1632 = vsub.s32 %v1613, %v1631
        %v1633 = vrot.slane %v1426, %v1632
        %v1634 = vlaneseq
        %v1635 = vshrl.u32 %v1634, 7
        %v1636 = vsub.s32 %v1613, %v1635
        %v1637 = vrot.slane %v1429, %v1636
        %v1638 = vlaneseq
        %v1639 = vshrl.u32 %v1638, 7
        %v1640 = vsub.s32 %v1613, %v1639
        %v1641 = vrot.slane %v1432, %v1640
        %v1642 = vlaneseq
        %v1643 = vshrl.u32 %v1642, 7
        %v1644 = vsub.s32 %v1613, %v1643
        %v1645 = vrot.slane %v1435, %v1644
        %vm1646 = vcmask 1041409
        %v1647 = vsel %vm1646, %v1621, %v1617
        %vm1648 = vcmask 1042434
        %v1649 = vsel %vm1648, %v1625, %v1647
        %vm1650 = vcmask 1043459
        %v1651 = vsel %vm1650, %v1629, %v1649
        %vm1652 = vcmask 1044484
        %v1653 = vsel %vm1652, %v1633, %v1651
        %vm1654 = vcmask 1045509
        %v1655 = vsel %vm1654, %v1637, %v1653
        %vm1656 = vcmask 1046534
        %v1657 = vsel %vm1656, %v1641, %v1655
        %vm1658 = vcmask 1047559
        %v1659 = vsel %vm1658, %v1645, %v1657
        %v1669 = vadd.s32 %v1613, 4294967288
        %v1670 = vlaneseq
        %v1671 = vshrl.u32 %v1670, 7
        %v1672 = vsub.s32 %v1669, %v1671
        %v1673 = vrot.slane %v1470, %v1672
        %v1674 = vlaneseq
        %v1675 = vshrl.u32 %v1674, 7
        %v1676 = vsub.s32 %v1669, %v1675
        %v1677 = vrot.slane %v1473, %v1676
        %v1678 = vlaneseq
        %v1679 = vshrl.u32 %v1678, 7
        %v1680 = vsub.s32 %v1669, %v1679
        %v1681 = vrot.slane %v1476, %v1680
        %v1682 = vlaneseq
        %v1683 = vshrl.u32 %v1682, 7
        %v1684 = vsub.s32 %v1669, %v1683
        %v1685 = vrot.slane %v1479, %v1684
        %v1686 = vlaneseq
        %v1687 = vshrl.u32 %v1686, 7
        %v1688 = vsub.s32 %v1669, %v1687
        %v1689 = vrot.slane %v1482, %v1688
        %v1690 = vlaneseq
        %v1691 = vshrl.u32 %v1690, 7
        %v1692 = vsub.s32 %v1669, %v1691
        %v1693 = vrot.slane %v1485, %v1692
        %v1694 = vlaneseq
        %v1695 = vshrl.u32 %v1694, 7
        %v1696 = vsub.s32 %v1669, %v1695
        %v1697 = vrot.slane %v1488, %v1696
        %v1698 = vlaneseq
        %v1699 = vshrl.u32 %v1698, 7
        %v1700 = vsub.s32 %v1669, %v1699
        %v1701 = vrot.slane %v1491, %v1700
        %v1702 = vsel %vm1646, %v1677, %v1673
        %v1703 = vsel %vm1648, %v1681, %v1702
        %v1704 = vsel %vm1650, %v1685, %v1703
        %v1705 = vsel %vm1652, %v1689, %v1704
        %v1706 = vsel %vm1654, %v1693, %v1705
        %v1707 = vsel %vm1656, %v1697, %v1706
        %v1708 = vsel %vm1658, %v1701, %v1707
        %v1718 = vadd.s32 %v1613, 4294967280
        %v1719 = vlaneseq
        %v1720 = vshrl.u32 %v1719, 7
        %v1721 = vsub.s32 %v1718, %v1720
        %v1722 = vrot.slane %v1526, %v1721
        %v1723 = vlaneseq
        %v1724 = vshrl.u32 %v1723, 7
        %v1725 = vsub.s32 %v1718, %v1724
        %v1726 = vrot.slane %v1529, %v1725
        %v1727 = vlaneseq
        %v1728 = vshrl.u32 %v1727, 7
        %v1729 = vsub.s32 %v1718, %v1728
        %v1730 = vrot.slane %v1532, %v1729
        %v1731 = vlaneseq
        %v1732 = vshrl.u32 %v1731, 7
        %v1733 = vsub.s32 %v1718, %v1732
        %v1734 = vrot.slane %v1535, %v1733
        %v1735 = vlaneseq
        %v1736 = vshrl.u32 %v1735, 7
        %v1737 = vsub.s32 %v1718, %v1736
        %v1738 = vrot.slane %v1538, %v1737
        %v1739 = vlaneseq
        %v1740 = vshrl.u32 %v1739, 7
        %v1741 = vsub.s32 %v1718, %v1740
        %v1742 = vrot.slane %v1541, %v1741
        %v1743 = vlaneseq
        %v1744 = vshrl.u32 %v1743, 7
        %v1745 = vsub.s32 %v1718, %v1744
        %v1746 = vrot.slane %v1544, %v1745
        %v1747 = vlaneseq
        %v1748 = vshrl.u32 %v1747, 7
        %v1749 = vsub.s32 %v1718, %v1748
        %v1750 = vrot.slane %v1547, %v1749
        %v1751 = vsel %vm1646, %v1726, %v1722
        %v1752 = vsel %vm1648, %v1730, %v1751
        %v1753 = vsel %vm1650, %v1734, %v1752
        %v1754 = vsel %vm1652, %v1738, %v1753
        %v1755 = vsel %vm1654, %v1742, %v1754
        %v1756 = vsel %vm1656, %v1746, %v1755
        %v1757 = vsel %vm1658, %v1750, %v1756
        %v1767 = vadd.s32 %v1613, 4294967272
        %v1768 = vlaneseq
        %v1769 = vshrl.u32 %v1768, 7
        %v1770 = vsub.s32 %v1767, %v1769
        %v1771 = vrot.slane %v1582, %v1770
        %v1772 = vlaneseq
        %v1773 = vshrl.u32 %v1772, 7
        %v1774 = vsub.s32 %v1767, %v1773
        %v1775 = vrot.slane %v1585, %v1774
        %v1776 = vlaneseq
        %v1777 = vshrl.u32 %v1776, 7
        %v1778 = vsub.s32 %v1767, %v1777
        %v1779 = vrot.slane %v1588, %v1778
        %v1780 = vlaneseq
        %v1781 = vshrl.u32 %v1780, 7
        %v1782 = vsub.s32 %v1767, %v1781
        %v1783 = vrot.slane %v1591, %v1782
        %v1784 = vlaneseq
        %v1785 = vshrl.u32 %v1784, 7
        %v1786 = vsub.s32 %v1767, %v1785
        %v1787 = vrot.slane %v1594, %v1786
        %v1788 = vlaneseq
        %v1789 = vshrl.u32 %v1788, 7
        %v1790 = vsub.s32 %v1767, %v1789
        %v1791 = vrot.slane %v1597, %v1790
        %v1792 = vlaneseq
        %v1793 = vshrl.u32 %v1792, 7
        %v1794 = vsub.s32 %v1767, %v1793
        %v1795 = vrot.slane %v1600, %v1794
        %v1796 = vlaneseq
        %v1797 = vshrl.u32 %v1796, 7
        %v1798 = vsub.s32 %v1767, %v1797
        %v1799 = vrot.slane %v1603, %v1798
        %v1800 = vsel %vm1646, %v1775, %v1771
        %v1801 = vsel %vm1648, %v1779, %v1800
        %v1802 = vsel %vm1650, %v1783, %v1801
        %v1803 = vsel %vm1652, %v1787, %v1802
        %v1804 = vsel %vm1654, %v1791, %v1803
        %v1805 = vsel %vm1656, %v1795, %v1804
        %v1806 = vsel %vm1658, %v1799, %v1805
        %v1808 = vsel %vm1225, %v1659, %v1708
        %vm1809 = vcmask 130048
        %v1810 = vsel %vm1809, %v1808, %v1757
        %vm1811 = vcmask 195584
        %v1812 = vsel %vm1811, %v1810, %v1806
        %v1813 = vld [vmem:[#allocation13] sm:$0xff]
        %v1814 = vld [vmem:[#allocation13 + $0x8] sm:$0xff]
        %v1815 = vld [vmem:[#allocation13 + $0x10] sm:$0xff]
        %v1816 = vld [vmem:[#allocation13 + $0x18] sm:$0xff]
        %v1817 = vld [vmem:[%s10] sm:$0x1]
        %v1819 = vlaneseq
        %v1820 = vshrl.u32 %v1819, 7
        %v1821 = vsub.s32 0, %v1820
        %v1822 = vrot.slane %v1817, %v1821
        %v1825 = vsel %vm543, %v1812, 0
        %v1828 = vsel %vm543, %v1813, 0
        %v1831 = vsel %vm543, %v1814, 0
        %v1834 = vsel %vm543, %v1815, 0
        %v1837 = vsel %vm543, %v1816, 0
        %1839 = vmatprep.subr.mxu0 0.0
        %1840 = vmatpush1.xpose.msra.mxu0 0.0
        %1841 = vmatprep.subr.mxu0 0.0
        %1842 = vmatpush1.xpose.msra.mxu0 0.0
        %1843 = vmatprep.subr.mxu0 0.0
        %1844 = vmatpush1.xpose.msra.mxu0 0.0
        %1845 = vmatprep.subr.mxu0 0.0
        %1846 = vmatpush1.xpose.msra.mxu0 0.0
        %1847 = vmatprep.subr.mxu0 0.0
        %1848 = vmatpush1.xpose.msra.mxu0 0.0
        %1849 = vmatprep.subr.mxu0 0.0
        %1850 = vmatpush1.xpose.msra.mxu0 0.0
        %1851 = vmatprep.subr.mxu0 0.0
        %1852 = vmatpush1.xpose.msra.mxu0 0.0
        %1853 = vmatprep.subr.mxu0 0.0
        %1854 = vmatpush1.xpose.msra.mxu0 0.0
        %1855 = vmatprep.subr.mxu0 0.0
        %1856 = vmatpush1.xpose.msra.mxu0 0.0
        %1857 = vmatprep.subr.mxu0 0.0
        %1858 = vmatpush1.xpose.msra.mxu0 0.0
        %1859 = vmatprep.subr.mxu0 0.0
        %1860 = vmatpush1.xpose.msra.mxu0 0.0
        %1861 = vmatprep.subr.mxu0 0.0
        %1862 = vmatpush1.xpose.msra.mxu0 0.0
        %1863 = vmatprep.subr.mxu0 0.0
        %1864 = vmatpush1.xpose.msra.mxu0 %v1837
        %1865 = vmatprep.subr.mxu0 0.0
        %1866 = vmatpush1.xpose.msra.mxu0 %v1834
        %1867 = vmatprep.subr.mxu0 0.0
        %1868 = vmatpush1.xpose.msra.mxu0 %v1831
        %1869 = vmatprep.subr.mxu0 0.0
        %1870 = vmatpush1.xpose.msra.mxu0 %v1828
        %1871 = vmatprep.subr.mxu0 0.0
        %1872 = vmatpush2.xpose.msra.mxu0 0.0
        %1873 = vmatprep.subr.mxu0 0.0
        %1874 = vmatpush2.xpose.msra.mxu0 0.0
        %1875 = vmatprep.subr.mxu0 0.0
        %1876 = vmatpush2.xpose.msra.mxu0 0.0
        %1877 = vmatprep.subr.mxu0 0.0
        %1878 = vmatpush2.xpose.msra.mxu0 0.0
        %1879 = vmatprep.subr.mxu0 0.0
        %1880 = vmatpush2.xpose.msra.mxu0 0.0
        %1881 = vmatprep.subr.mxu0 0.0
        %1882 = vmatpush2.xpose.msra.mxu0 0.0
        %1883 = vmatprep.subr.mxu0 0.0
        %1884 = vmatpush2.xpose.msra.mxu0 0.0
        %1885 = vmatprep.subr.mxu0 0.0
        %1886 = vmatpush2.xpose.msra.mxu0 0.0
        %1887 = vmatprep.subr.mxu0 0.0
        %1888 = vmatpush2.xpose.msra.mxu0 0.0
        %1889 = vmatprep.subr.mxu0 0.0
        %1890 = vmatpush2.xpose.msra.mxu0 0.0
        %1891 = vmatprep.subr.mxu0 0.0
        %1892 = vmatpush2.xpose.msra.mxu0 0.0
        %1893 = vmatprep.subr.mxu0 0.0
        %1894 = vmatpush2.xpose.msra.mxu0 0.0
        %1895 = vmatprep.subr.mxu0 0.0
        %1896 = vmatpush2.xpose.msra.mxu0 0.0
        %1897 = vmatprep.subr.mxu0 0.0
        %1898 = vmatpush2.xpose.msra.mxu0 0.0
        %1899 = vmatprep.subr.mxu0 0.0
        %1900 = vmatpush2.xpose.msra.mxu0 0.0
        %1901 = vmatprep.subr.mxu0 0.0
        %1902 = vmatpush2.xpose.msra.mxu0 0.0
        %1903 = vmatprep.mubr.f32.mxu0 0.0
        %1904 = vmatmul.mubr.f32.gmra.mxu0 %v1825
        %v1905 = vpop.f32.mrf.mxu0
        %v1906 = vadd.f32 %v1822, %v1905
        %v1907 = vpop.f32.mrf.mxu0
        %1908 = vdwg.mxu0
        %1909 = vst.msk [vmem:[%s530] sm:$0xff] %vm543, %v1906
        %s1910 = sand.u32 %s287, 1
        %s1911 = scalar_lea.sflag [#allocation4], %s1910
        %s1912 = sand.u32 %s287, 1
        %s1913 = smul.addr %s1912, 8
        %s1914 = scalar_lea.vmem [#allocation14], %s1913
        // Predicated region
        $region93: #{tpu_custom_call.1} parent=63 // pred_check
          %p1915 = pneg %p297
        $region94: #{tpu_custom_call.1} parent=63 // pred_check_branch
          %1917 = sbr.rel (%p1915) target = $region96
        $region95: #{tpu_custom_call.1} parent=63 // pred_region
          %s1919 = ssub.s32 128, 128
          %1920 = vsyncadd %s1911, %s1919
          %s1921 = smul.addr %s33, 128
          %s1922 = scalar_lea.hbm %s11, %s1921
          %s1924 = sshll.u32 %s1914, 4
          %s1925 = int_to_ptr.vmem [resolvable:$true] %s1924
          %1927 = dma.vmem_to_hbm [thread:$0]  %s1925, 128, %s1922, %s1911
        $region96: #{tpu_custom_call.1} parent=63 // pred_fallthru
          _
      $region64: #{tpu_custom_call.1} parent=5 // pred_fallthru
        _
      %p1928 = scmp.le.s32.totalorder 2, %s28
      // Predicated region
      $region97: #{tpu_custom_call.1} parent=5 // pred_check
        %p1929 = pneg %p1928
      $region98: #{tpu_custom_call.1} parent=5 // pred_check_branch
        %1931 = sbr.rel (%p1929) target = $region100
      $region99: #{tpu_custom_call.1} parent=5 // pred_region
        %s1932 = ssub.s32 %s28, 2
        // Predicated region
        $region101: #{tpu_custom_call.1} parent=99 // pred_check
          %p1933 = pneg %p303
        $region102: #{tpu_custom_call.1} parent=99 // pred_check_branch
          %1935 = sbr.rel (%p1933) target = $region104
        $region103: #{tpu_custom_call.1} parent=99 // pred_region
          %s1936 = sand.u32 %s288, 1
          %s1937 = scalar_lea.sflag [#allocation4], %s1936
          %s1938 = sand.u32 %s288, 1
          %s1939 = smul.addr %s1938, 8
          %s1940 = scalar_lea.vmem [#allocation14], %s1939
          %1941 = dma.done %s1937, 128
        $region104: #{tpu_custom_call.1} parent=99 // pred_fallthru
          _
      $region100: #{tpu_custom_call.1} parent=5 // pred_fallthru
        _
    $region6: #{tpu_custom_call.1} parent=1 // loop_footer
      %s32 = sadd.s32 1, %s28
    $region7: #{tpu_custom_call.1} parent=1 // loop_footer_branch
      %27 = sbr.rel target = $region3
    $region8: #{tpu_custom_call.1} parent=1 // loop_exit
      _
    %1942 = vsyncpa [#allocation3], 1
    %s1943 = scalar_lea.sflag [#allocation3], 1
    %1944 = vsyncpa %s1943, 1
    %1945 = vsyncpa [#allocation6], 1
    %s1946 = scalar_lea.sflag [#allocation6], 1
    %1947 = vsyncpa %s1946, 1
    %1948 = vsyncpa [#allocation9], 1
    %1949 = vsyncpa [#allocation12], 1
    %1950 = vsyncpa [#allocation4], 1
    %s1951 = scalar_lea.sflag [#allocation4], 1
    %1952 = vsyncpa %s1951, 1

</llo_original>
